<compile_context>
chip_gen: v5e
topology: v5e:2x2
jax: 0.10.0
libtpu: 0.0.40
codegen_flags: <defaults>
</compile_context>

<pallas_src>
import functools

import jax
import jax.numpy as jnp
from jax.experimental import pallas as pl
from jax.experimental.pallas import tpu as pltpu


def _resnet_block_kernel(x_ref, w1_ref, b1_ref, w2_ref, b2_ref, o_ref, *, H, W, C):
    """One image, channels-first flat layout (C, H*W):
    reflect-pad conv3x3 + foldedBN + ReLU -> reflect-pad conv3x3 + foldedBN,
    then residual add with the input. Everything stays in VMEM/vregs."""
    HW = H * W
    x = x_ref[0]  # (C, HW) f32; channels on sublanes, H*W on lanes (lane-dense)

    # Boundary masks for the reflection padding (computed once, reused by both stages).
    lane = jax.lax.broadcasted_iota(jnp.int32, (1, HW), 1)
    col = lane % W
    is_col_first = col == 0                 # x == 0
    is_col_last = col == W - 1              # x == W-1
    is_row_first = lane < W                 # y == 0
    is_row_last = lane >= (H - 1) * W       # y == H-1

    def conv3x3_reflect_bn(v, w_ref, b_ref):
        # Column-shifted neighbours via lane rotation (XLU), reflected at the edges (VPU select).
        left = pltpu.roll(v, shift=1, axis=1)            # value at (y, x-1), lane-wrapped
        right = pltpu.roll(v, shift=HW - 1, axis=1)      # value at (y, x+1), lane-wrapped
        col_views = (
            jnp.where(is_col_first, right, left),        # kx=0 (dx=-1): reflect col 0 -> 1
            v,                                           # kx=1 (dx= 0)
            jnp.where(is_col_last, left, right),         # kx=2 (dx=+1): reflect col W-1 -> W-2
        )
        acc = jnp.zeros((C, HW), jnp.float32)
        for kx, cv in enumerate(col_views):
            up = pltpu.roll(cv, shift=W, axis=1)         # value at (y-1, x+dx)
            down = pltpu.roll(cv, shift=HW - W, axis=1)  # value at (y+1, x+dx)
            row_views = (
                jnp.where(is_row_first, down, up),       # ky=0 (dy=-1): reflect row 0 -> 1
                cv,                                      # ky=1 (dy= 0)
                jnp.where(is_row_last, up, down),        # ky=2 (dy=+1): reflect row H-1 -> H-2
            )
            for ky, rv in enumerate(row_views):
                # (C_out, C_in) @ (C_in, HW) -> (C_out, HW): lane-dense MXU result,
                # accumulated in f32; no im2col patch is materialized.
                acc = acc + jnp.dot(w_ref[ky * 3 + kx], rv,
                                    preferred_element_type=jnp.float32)
        return acc + b_ref[...]                          # folded-BN bias, (C,1) lane-broadcast

    # Stage 1: conv + folded BN + ReLU.
    y1 = jnp.maximum(conv3x3_reflect_bn(x, w1_ref, b1_ref), 0.0)
    # TODO(synk): Dropout(p) is identity in eval mode; no mask applied.

    # Stage 2: conv + folded BN (no ReLU), intermediate never leaves VMEM/vregs.
    y2 = conv3x3_reflect_bn(y1, w2_ref, b2_ref)

    # Residual add in f32; output slab is lane-dense (unmasked stores).
    o_ref[0] = x + y2


def resnet_block(x_nchw, params):
    """ResnetBlock forward. Input/output are NCHW (PyTorch layout); internally the
    spatial dims are flattened (free reshape, no transpose) to (N, C, H*W)."""
    N, C, H, W = x_nchw.shape
    assert H >= 2 and W >= 2, "ReflectionPad2d(1) requires H, W >= 2"
    x = x_nchw.reshape(N, C, H * W).astype(jnp.float32)

    kern = functools.partial(_resnet_block_kernel, H=H, W=W, C=C)
    out = pl.pallas_call(
        kern,
        out_shape=jax.ShapeDtypeStruct((N, C, H * W), jnp.float32),
        grid=(N,),
        in_specs=[
            pl.BlockSpec((1, C, H * W), lambda b: (b, 0, 0)),   # image, lane-dense
            pl.BlockSpec((9, C, C), lambda b: (0, 0, 0)),        # w1: (tap, co, ci)
            pl.BlockSpec((C, 1), lambda b: (0, 0)),              # b1
            pl.BlockSpec((9, C, C), lambda b: (0, 0, 0)),        # w2
            pl.BlockSpec((C, 1), lambda b: (0, 0)),              # b2
        ],
        out_specs=pl.BlockSpec((1, C, H * W), lambda b: (b, 0, 0)),
        compiler_params=pltpu.CompilerParams(dimension_semantics=("parallel",)),
    )(x, params["w1"], params["b1"], params["w2"], params["b2"])
    return out.reshape(N, C, H, W)


def _make_params(key, c):
    """Deterministic params; eval-mode BN folded: per-output-channel scale is
    multiplied into the conv weights, only a per-channel bias vector remains.
    Weight layout: (tap = ky*3+kx, c_out, c_in) for W @ view matmuls."""
    ks = jax.random.split(key, 10)
    eps = 1e-5

    def conv_w(k):
        std = (2.0 / (c * 9)) ** 0.5
        w = std * jax.random.normal(k, (c, c, 3, 3), jnp.float32)     # OIHW
        return jnp.transpose(w, (2, 3, 0, 1)).reshape(9, c, c)        # (tap, co, ci)

    def bn_fold(kg, kb, km, kv):
        gamma = 1.0 + 0.1 * jax.random.normal(kg, (c,), jnp.float32)
        beta = 0.1 * jax.random.normal(kb, (c,), jnp.float32)
        mean = 0.05 * jax.random.normal(km, (c,), jnp.float32)
        var = 1.0 + 0.1 * jnp.abs(jax.random.normal(kv, (c,), jnp.float32))
        scale = gamma / jnp.sqrt(var + eps)
        bias = beta - mean * scale
        return scale, bias

    s1, b1 = bn_fold(ks[1], ks[2], ks[3], ks[4])
    s2, b2 = bn_fold(ks[6], ks[7], ks[8], ks[9])
    w1 = conv_w(ks[0]) * s1[None, :, None]     # fold BN scale over c_out
    w2 = conv_w(ks[5]) * s2[None, :, None]
    return {"w1": w1, "b1": b1.reshape(c, 1),
            "w2": w2, "b2": b2.reshape(c, 1)}


def _reference(x_nchw, params):
    """Pure-JAX NCHW reference using lax.conv at HIGHEST precision."""
    C = x_nchw.shape[1]
    x = x_nchw.astype(jnp.float32)

    def conv_stage(y, w9, bias):
        yp = jnp.pad(y, ((0, 0), (0, 0), (1, 1), (1, 1)), mode="reflect")
        w = jnp.transpose(w9.reshape(3, 3, C, C), (2, 3, 0, 1))   # (tap,co,ci) -> OIHW
        out = jax.lax.conv_general_dilated(
            yp, w, (1, 1), "VALID",
            dimension_numbers=("NCHW", "OIHW", "NCHW"),
            precision=jax.lax.Precision.HIGHEST)
        return out + bias.reshape(1, C, 1, 1)

    y1 = jnp.maximum(conv_stage(x, params["w1"], params["b1"]), 0.0)
    y2 = conv_stage(y1, params["w2"], params["b2"])
    return x + y2


if __name__ == "__main__":
    key = jax.random.PRNGKey(0)
    k_x, k_p = jax.random.split(key)

    N, C, H, W = 2, 4, 16, 16
    x = jax.random.normal(k_x, (N, C, H, W), jnp.float32)   # PyTorch NCHW input
    params = _make_params(k_p, C)                            # f32, BN folded

    out = jax.block_until_ready(resnet_block(x, params))
    assert out.shape == (N, C, H, W), out.shape

    ref = _reference(x, params)
    err = float(jnp.max(jnp.abs(out - ref)))
    assert jnp.allclose(out, ref, rtol=1e-4, atol=1e-4), err

    print("KERNEL_OK")
</pallas_src>

<mosaic_0001>
module attributes {stable_mosaic.version = 11 : i64} {
  func.func @_resnet_block_kernel(%arg0: i32, %arg1: memref<1x4x256xf32, #tpu.memory_space<vmem>>, %arg2: memref<9x4x4xf32, #tpu.memory_space<vmem>>, %arg3: memref<4x1xf32, #tpu.memory_space<vmem>>, %arg4: memref<9x4x4xf32, #tpu.memory_space<vmem>>, %arg5: memref<4x1xf32, #tpu.memory_space<vmem>>, %arg6: memref<1x4x256xf32, #tpu.memory_space<vmem>>) attributes {dimension_semantics = [#tpu.dimension_semantics<parallel>], iteration_bounds = array<i64: 2>, scalar_prefetch = 0 : i64, scratch_operands = 0 : i64, tpu.core_type = #tpu.core_type<tc>, window_params = [{transform_indices = @transform_0, window_bounds = array<i64: 1, 4, 256>}, {pipeline_mode = #tpu.pipeline_mode<synchronous>, transform_indices = @transform_1, window_bounds = array<i64: 9, 4, 4>}, {pipeline_mode = #tpu.pipeline_mode<synchronous>, transform_indices = @transform_2, window_bounds = array<i64: 4, 1>}, {pipeline_mode = #tpu.pipeline_mode<synchronous>, transform_indices = @transform_3, window_bounds = array<i64: 9, 4, 4>}, {pipeline_mode = #tpu.pipeline_mode<synchronous>, transform_indices = @transform_4, window_bounds = array<i64: 4, 1>}, {transform_indices = @transform_5, window_bounds = array<i64: 1, 4, 256>}]} {
    %c0 = arith.constant 0 : index
    %c0_0 = arith.constant 0 : index
    %c0_1 = arith.constant 0 : index
    %0 = vector.load %arg1[%c0, %c0_0, %c0_1] : memref<1x4x256xf32, #tpu.memory_space<vmem>>, vector<1x4x256xf32>
    %1 = vector.shape_cast %0 : vector<1x4x256xf32> to vector<4x256xf32>
    %2 = tpu.iota {dimensions = array<i32: 1>} : vector<1x256xi32>
    %c16_i32 = arith.constant 16 : i32
    %c0_i32 = arith.constant 0 : i32
    %3 = arith.cmpi eq, %c16_i32, %c0_i32 : i32
    %c1_i32 = arith.constant 1 : i32
    %4 = arith.select %3, %c1_i32, %c16_i32 : i32
    %5 = vector.broadcast %4 : i32 to vector<1x256xi32>
    %6 = arith.remsi %2, %5 : vector<1x256xi32>
    %c0_i32_2 = arith.constant 0 : i32
    %7 = vector.broadcast %c0_i32_2 : i32 to vector<1x256xi32>
    %8 = arith.cmpi ne, %6, %7 : vector<1x256xi32>
    %c0_i32_3 = arith.constant 0 : i32
    %9 = vector.broadcast %c0_i32_3 : i32 to vector<1x256xi32>
    %10 = arith.cmpi slt, %6, %9 : vector<1x256xi32>
    %c0_i32_4 = arith.constant 0 : i32
    %11 = arith.cmpi slt, %4, %c0_i32_4 : i32
    %12 = vector.broadcast %11 : i1 to vector<1x256xi1>
    %13 = vector.broadcast %12 : vector<1x256xi1> to vector<1x256xi1>
    %14 = arith.xori %10, %13 : vector<1x256xi1>
    %15 = arith.andi %14, %8 : vector<1x256xi1>
    %16 = vector.broadcast %4 : i32 to vector<1x256xi32>
    %17 = arith.addi %6, %16 : vector<1x256xi32>
    %18 = arith.select %15, %17, %6 : vector<1x256xi1>, vector<1x256xi32>
    %c0_i32_5 = arith.constant 0 : i32
    %19 = vector.broadcast %c0_i32_5 : i32 to vector<1x256xi32>
    %20 = arith.cmpi eq, %18, %19 : vector<1x256xi32>
    %c15_i32 = arith.constant 15 : i32
    %21 = vector.broadcast %c15_i32 : i32 to vector<1x256xi32>
    %22 = arith.cmpi eq, %18, %21 : vector<1x256xi32>
    %c16_i32_6 = arith.constant 16 : i32
    %23 = vector.broadcast %c16_i32_6 : i32 to vector<1x256xi32>
    %24 = arith.cmpi slt, %2, %23 : vector<1x256xi32>
    %c240_i32 = arith.constant 240 : i32
    %25 = vector.broadcast %c240_i32 : i32 to vector<1x256xi32>
    %26 = arith.cmpi sge, %2, %25 : vector<1x256xi32>
    %c1_i32_7 = arith.constant 1 : i32
    %27 = tpu.dynamic_rotate %1 by %c1_i32_7 dim 1 : vector<4x256xf32>, i32 -> vector<4x256xf32>
    %c255_i32 = arith.constant 255 : i32
    %28 = tpu.dynamic_rotate %1 by %c255_i32 dim 1 : vector<4x256xf32>, i32 -> vector<4x256xf32>
    %29 = vector.shape_cast %20 : vector<1x256xi1> to vector<1x256xi1>
    %30 = vector.broadcast %29 : vector<1x256xi1> to vector<4x256xi1>
    %31 = arith.select %30, %28, %27 : vector<4x256xi1>, vector<4x256xf32>
    %32 = vector.shape_cast %22 : vector<1x256xi1> to vector<1x256xi1>
    %33 = vector.broadcast %32 : vector<1x256xi1> to vector<4x256xi1>
    %34 = arith.select %33, %27, %28 : vector<4x256xi1>, vector<4x256xf32>
    %cst = arith.constant 0.000000e+00 : f32
    %35 = vector.broadcast %cst : f32 to vector<4x256xf32>
    %c16_i32_8 = arith.constant 16 : i32
    %36 = tpu.dynamic_rotate %31 by %c16_i32_8 dim 1 : vector<4x256xf32>, i32 -> vector<4x256xf32>
    %c240_i32_9 = arith.constant 240 : i32
    %37 = tpu.dynamic_rotate %31 by %c240_i32_9 dim 1 : vector<4x256xf32>, i32 -> vector<4x256xf32>
    %38 = vector.shape_cast %24 : vector<1x256xi1> to vector<1x256xi1>
    %39 = vector.broadcast %38 : vector<1x256xi1> to vector<4x256xi1>
    %40 = arith.select %39, %37, %36 : vector<4x256xi1>, vector<4x256xf32>
    %41 = vector.shape_cast %26 : vector<1x256xi1> to vector<1x256xi1>
    %42 = vector.broadcast %41 : vector<1x256xi1> to vector<4x256xi1>
    %43 = arith.select %42, %36, %37 : vector<4x256xi1>, vector<4x256xf32>
    %c0_10 = arith.constant 0 : index
    %c0_11 = arith.constant 0 : index
    %c0_12 = arith.constant 0 : index
    %44 = vector.load %arg2[%c0_10, %c0_11, %c0_12] : memref<9x4x4xf32, #tpu.memory_space<vmem>>, vector<1x4x4xf32>
    %45 = vector.shape_cast %44 : vector<1x4x4xf32> to vector<4x4xf32>
    %cst_13 = arith.constant dense<0.000000e+00> : vector<4x256xf32>
    %46 = tpu.matmul %45, %40, %cst_13 {dimension_numbers = #tpu.dot_dimension_numbers<[1], [0], [0], [1], [0, 0, 1, 1], [], []>} : vector<4x4xf32>, vector<4x256xf32>, vector<4x256xf32> -> vector<4x256xf32>
    %47 = arith.addf %35, %46 : vector<4x256xf32>
    %c3 = arith.constant 3 : index
    %c0_14 = arith.constant 0 : index
    %c0_15 = arith.constant 0 : index
    %48 = vector.load %arg2[%c3, %c0_14, %c0_15] : memref<9x4x4xf32, #tpu.memory_space<vmem>>, vector<1x4x4xf32>
    %49 = vector.shape_cast %48 : vector<1x4x4xf32> to vector<4x4xf32>
    %cst_16 = arith.constant dense<0.000000e+00> : vector<4x256xf32>
    %50 = tpu.matmul %49, %31, %cst_16 {dimension_numbers = #tpu.dot_dimension_numbers<[1], [0], [0], [1], [0, 0, 1, 1], [], []>} : vector<4x4xf32>, vector<4x256xf32>, vector<4x256xf32> -> vector<4x256xf32>
    %51 = arith.addf %47, %50 : vector<4x256xf32>
    %c6 = arith.constant 6 : index
    %c0_17 = arith.constant 0 : index
    %c0_18 = arith.constant 0 : index
    %52 = vector.load %arg2[%c6, %c0_17, %c0_18] : memref<9x4x4xf32, #tpu.memory_space<vmem>>, vector<1x4x4xf32>
    %53 = vector.shape_cast %52 : vector<1x4x4xf32> to vector<4x4xf32>
    %cst_19 = arith.constant dense<0.000000e+00> : vector<4x256xf32>
    %54 = tpu.matmul %53, %43, %cst_19 {dimension_numbers = #tpu.dot_dimension_numbers<[1], [0], [0], [1], [0, 0, 1, 1], [], []>} : vector<4x4xf32>, vector<4x256xf32>, vector<4x256xf32> -> vector<4x256xf32>
    %55 = arith.addf %51, %54 : vector<4x256xf32>
    %c16_i32_20 = arith.constant 16 : i32
    %56 = tpu.dynamic_rotate %1 by %c16_i32_20 dim 1 : vector<4x256xf32>, i32 -> vector<4x256xf32>
    %c240_i32_21 = arith.constant 240 : i32
    %57 = tpu.dynamic_rotate %1 by %c240_i32_21 dim 1 : vector<4x256xf32>, i32 -> vector<4x256xf32>
    %58 = vector.shape_cast %24 : vector<1x256xi1> to vector<1x256xi1>
    %59 = vector.broadcast %58 : vector<1x256xi1> to vector<4x256xi1>
    %60 = arith.select %59, %57, %56 : vector<4x256xi1>, vector<4x256xf32>
    %61 = vector.shape_cast %26 : vector<1x256xi1> to vector<1x256xi1>
    %62 = vector.broadcast %61 : vector<1x256xi1> to vector<4x256xi1>
    %63 = arith.select %62, %56, %57 : vector<4x256xi1>, vector<4x256xf32>
    %c1 = arith.constant 1 : index
    %c0_22 = arith.constant 0 : index
    %c0_23 = arith.constant 0 : index
    %64 = vector.load %arg2[%c1, %c0_22, %c0_23] : memref<9x4x4xf32, #tpu.memory_space<vmem>>, vector<1x4x4xf32>
    %65 = vector.shape_cast %64 : vector<1x4x4xf32> to vector<4x4xf32>
    %cst_24 = arith.constant dense<0.000000e+00> : vector<4x256xf32>
    %66 = tpu.matmul %65, %60, %cst_24 {dimension_numbers = #tpu.dot_dimension_numbers<[1], [0], [0], [1], [0, 0, 1, 1], [], []>} : vector<4x4xf32>, vector<4x256xf32>, vector<4x256xf32> -> vector<4x256xf32>
    %67 = arith.addf %55, %66 : vector<4x256xf32>
    %c4 = arith.constant 4 : index
    %c0_25 = arith.constant 0 : index
    %c0_26 = arith.constant 0 : index
    %68 = vector.load %arg2[%c4, %c0_25, %c0_26] : memref<9x4x4xf32, #tpu.memory_space<vmem>>, vector<1x4x4xf32>
    %69 = vector.shape_cast %68 : vector<1x4x4xf32> to vector<4x4xf32>
    %cst_27 = arith.constant dense<0.000000e+00> : vector<4x256xf32>
    %70 = tpu.matmul %69, %1, %cst_27 {dimension_numbers = #tpu.dot_dimension_numbers<[1], [0], [0], [1], [0, 0, 1, 1], [], []>} : vector<4x4xf32>, vector<4x256xf32>, vector<4x256xf32> -> vector<4x256xf32>
    %71 = arith.addf %67, %70 : vector<4x256xf32>
    %c7 = arith.constant 7 : index
    %c0_28 = arith.constant 0 : index
    %c0_29 = arith.constant 0 : index
    %72 = vector.load %arg2[%c7, %c0_28, %c0_29] : memref<9x4x4xf32, #tpu.memory_space<vmem>>, vector<1x4x4xf32>
    %73 = vector.shape_cast %72 : vector<1x4x4xf32> to vector<4x4xf32>
    %cst_30 = arith.constant dense<0.000000e+00> : vector<4x256xf32>
    %74 = tpu.matmul %73, %63, %cst_30 {dimension_numbers = #tpu.dot_dimension_numbers<[1], [0], [0], [1], [0, 0, 1, 1], [], []>} : vector<4x4xf32>, vector<4x256xf32>, vector<4x256xf32> -> vector<4x256xf32>
    %75 = arith.addf %71, %74 : vector<4x256xf32>
    %c16_i32_31 = arith.constant 16 : i32
    %76 = tpu.dynamic_rotate %34 by %c16_i32_31 dim 1 : vector<4x256xf32>, i32 -> vector<4x256xf32>
    %c240_i32_32 = arith.constant 240 : i32
    %77 = tpu.dynamic_rotate %34 by %c240_i32_32 dim 1 : vector<4x256xf32>, i32 -> vector<4x256xf32>
    %78 = vector.shape_cast %24 : vector<1x256xi1> to vector<1x256xi1>
    %79 = vector.broadcast %78 : vector<1x256xi1> to vector<4x256xi1>
    %80 = arith.select %79, %77, %76 : vector<4x256xi1>, vector<4x256xf32>
    %81 = vector.shape_cast %26 : vector<1x256xi1> to vector<1x256xi1>
    %82 = vector.broadcast %81 : vector<1x256xi1> to vector<4x256xi1>
    %83 = arith.select %82, %76, %77 : vector<4x256xi1>, vector<4x256xf32>
    %c2 = arith.constant 2 : index
    %c0_33 = arith.constant 0 : index
    %c0_34 = arith.constant 0 : index
    %84 = vector.load %arg2[%c2, %c0_33, %c0_34] : memref<9x4x4xf32, #tpu.memory_space<vmem>>, vector<1x4x4xf32>
    %85 = vector.shape_cast %84 : vector<1x4x4xf32> to vector<4x4xf32>
    %cst_35 = arith.constant dense<0.000000e+00> : vector<4x256xf32>
    %86 = tpu.matmul %85, %80, %cst_35 {dimension_numbers = #tpu.dot_dimension_numbers<[1], [0], [0], [1], [0, 0, 1, 1], [], []>} : vector<4x4xf32>, vector<4x256xf32>, vector<4x256xf32> -> vector<4x256xf32>
    %87 = arith.addf %75, %86 : vector<4x256xf32>
    %c5 = arith.constant 5 : index
    %c0_36 = arith.constant 0 : index
    %c0_37 = arith.constant 0 : index
    %88 = vector.load %arg2[%c5, %c0_36, %c0_37] : memref<9x4x4xf32, #tpu.memory_space<vmem>>, vector<1x4x4xf32>
    %89 = vector.shape_cast %88 : vector<1x4x4xf32> to vector<4x4xf32>
    %cst_38 = arith.constant dense<0.000000e+00> : vector<4x256xf32>
    %90 = tpu.matmul %89, %34, %cst_38 {dimension_numbers = #tpu.dot_dimension_numbers<[1], [0], [0], [1], [0, 0, 1, 1], [], []>} : vector<4x4xf32>, vector<4x256xf32>, vector<4x256xf32> -> vector<4x256xf32>
    %91 = arith.addf %87, %90 : vector<4x256xf32>
    %c8 = arith.constant 8 : index
    %c0_39 = arith.constant 0 : index
    %c0_40 = arith.constant 0 : index
    %92 = vector.load %arg2[%c8, %c0_39, %c0_40] : memref<9x4x4xf32, #tpu.memory_space<vmem>>, vector<1x4x4xf32>
    %93 = vector.shape_cast %92 : vector<1x4x4xf32> to vector<4x4xf32>
    %cst_41 = arith.constant dense<0.000000e+00> : vector<4x256xf32>
    %94 = tpu.matmul %93, %83, %cst_41 {dimension_numbers = #tpu.dot_dimension_numbers<[1], [0], [0], [1], [0, 0, 1, 1], [], []>} : vector<4x4xf32>, vector<4x256xf32>, vector<4x256xf32> -> vector<4x256xf32>
    %95 = arith.addf %91, %94 : vector<4x256xf32>
    %c0_42 = arith.constant 0 : index
    %c0_43 = arith.constant 0 : index
    %96 = vector.load %arg3[%c0_42, %c0_43] : memref<4x1xf32, #tpu.memory_space<vmem>>, vector<4x1xf32>
    %97 = vector.broadcast %96 : vector<4x1xf32> to vector<4x256xf32>
    %98 = arith.addf %95, %97 : vector<4x256xf32>
    %cst_44 = arith.constant 0.000000e+00 : f32
    %99 = vector.broadcast %cst_44 : f32 to vector<4x256xf32>
    %100 = arith.maximumf %98, %99 : vector<4x256xf32>
    %c1_i32_45 = arith.constant 1 : i32
    %101 = tpu.dynamic_rotate %100 by %c1_i32_45 dim 1 : vector<4x256xf32>, i32 -> vector<4x256xf32>
    %c255_i32_46 = arith.constant 255 : i32
    %102 = tpu.dynamic_rotate %100 by %c255_i32_46 dim 1 : vector<4x256xf32>, i32 -> vector<4x256xf32>
    %103 = vector.shape_cast %20 : vector<1x256xi1> to vector<1x256xi1>
    %104 = vector.broadcast %103 : vector<1x256xi1> to vector<4x256xi1>
    %105 = arith.select %104, %102, %101 : vector<4x256xi1>, vector<4x256xf32>
    %106 = vector.shape_cast %22 : vector<1x256xi1> to vector<1x256xi1>
    %107 = vector.broadcast %106 : vector<1x256xi1> to vector<4x256xi1>
    %108 = arith.select %107, %101, %102 : vector<4x256xi1>, vector<4x256xf32>
    %cst_47 = arith.constant 0.000000e+00 : f32
    %109 = vector.broadcast %cst_47 : f32 to vector<4x256xf32>
    %c16_i32_48 = arith.constant 16 : i32
    %110 = tpu.dynamic_rotate %105 by %c16_i32_48 dim 1 : vector<4x256xf32>, i32 -> vector<4x256xf32>
    %c240_i32_49 = arith.constant 240 : i32
    %111 = tpu.dynamic_rotate %105 by %c240_i32_49 dim 1 : vector<4x256xf32>, i32 -> vector<4x256xf32>
    %112 = vector.shape_cast %24 : vector<1x256xi1> to vector<1x256xi1>
    %113 = vector.broadcast %112 : vector<1x256xi1> to vector<4x256xi1>
    %114 = arith.select %113, %111, %110 : vector<4x256xi1>, vector<4x256xf32>
    %115 = vector.shape_cast %26 : vector<1x256xi1> to vector<1x256xi1>
    %116 = vector.broadcast %115 : vector<1x256xi1> to vector<4x256xi1>
    %117 = arith.select %116, %110, %111 : vector<4x256xi1>, vector<4x256xf32>
    %c0_50 = arith.constant 0 : index
    %c0_51 = arith.constant 0 : index
    %c0_52 = arith.constant 0 : index
    %118 = vector.load %arg4[%c0_50, %c0_51, %c0_52] : memref<9x4x4xf32, #tpu.memory_space<vmem>>, vector<1x4x4xf32>
    %119 = vector.shape_cast %118 : vector<1x4x4xf32> to vector<4x4xf32>
    %cst_53 = arith.constant dense<0.000000e+00> : vector<4x256xf32>
    %120 = tpu.matmul %119, %114, %cst_53 {dimension_numbers = #tpu.dot_dimension_numbers<[1], [0], [0], [1], [0, 0, 1, 1], [], []>} : vector<4x4xf32>, vector<4x256xf32>, vector<4x256xf32> -> vector<4x256xf32>
    %121 = arith.addf %109, %120 : vector<4x256xf32>
    %c3_54 = arith.constant 3 : index
    %c0_55 = arith.constant 0 : index
    %c0_56 = arith.constant 0 : index
    %122 = vector.load %arg4[%c3_54, %c0_55, %c0_56] : memref<9x4x4xf32, #tpu.memory_space<vmem>>, vector<1x4x4xf32>
    %123 = vector.shape_cast %122 : vector<1x4x4xf32> to vector<4x4xf32>
    %cst_57 = arith.constant dense<0.000000e+00> : vector<4x256xf32>
    %124 = tpu.matmul %123, %105, %cst_57 {dimension_numbers = #tpu.dot_dimension_numbers<[1], [0], [0], [1], [0, 0, 1, 1], [], []>} : vector<4x4xf32>, vector<4x256xf32>, vector<4x256xf32> -> vector<4x256xf32>
    %125 = arith.addf %121, %124 : vector<4x256xf32>
    %c6_58 = arith.constant 6 : index
    %c0_59 = arith.constant 0 : index
    %c0_60 = arith.constant 0 : index
    %126 = vector.load %arg4[%c6_58, %c0_59, %c0_60] : memref<9x4x4xf32, #tpu.memory_space<vmem>>, vector<1x4x4xf32>
    %127 = vector.shape_cast %126 : vector<1x4x4xf32> to vector<4x4xf32>
    %cst_61 = arith.constant dense<0.000000e+00> : vector<4x256xf32>
    %128 = tpu.matmul %127, %117, %cst_61 {dimension_numbers = #tpu.dot_dimension_numbers<[1], [0], [0], [1], [0, 0, 1, 1], [], []>} : vector<4x4xf32>, vector<4x256xf32>, vector<4x256xf32> -> vector<4x256xf32>
    %129 = arith.addf %125, %128 : vector<4x256xf32>
    %c16_i32_62 = arith.constant 16 : i32
    %130 = tpu.dynamic_rotate %100 by %c16_i32_62 dim 1 : vector<4x256xf32>, i32 -> vector<4x256xf32>
    %c240_i32_63 = arith.constant 240 : i32
    %131 = tpu.dynamic_rotate %100 by %c240_i32_63 dim 1 : vector<4x256xf32>, i32 -> vector<4x256xf32>
    %132 = vector.shape_cast %24 : vector<1x256xi1> to vector<1x256xi1>
    %133 = vector.broadcast %132 : vector<1x256xi1> to vector<4x256xi1>
    %134 = arith.select %133, %131, %130 : vector<4x256xi1>, vector<4x256xf32>
    %135 = vector.shape_cast %26 : vector<1x256xi1> to vector<1x256xi1>
    %136 = vector.broadcast %135 : vector<1x256xi1> to vector<4x256xi1>
    %137 = arith.select %136, %130, %131 : vector<4x256xi1>, vector<4x256xf32>
    %c1_64 = arith.constant 1 : index
    %c0_65 = arith.constant 0 : index
    %c0_66 = arith.constant 0 : index
    %138 = vector.load %arg4[%c1_64, %c0_65, %c0_66] : memref<9x4x4xf32, #tpu.memory_space<vmem>>, vector<1x4x4xf32>
    %139 = vector.shape_cast %138 : vector<1x4x4xf32> to vector<4x4xf32>
    %cst_67 = arith.constant dense<0.000000e+00> : vector<4x256xf32>
    %140 = tpu.matmul %139, %134, %cst_67 {dimension_numbers = #tpu.dot_dimension_numbers<[1], [0], [0], [1], [0, 0, 1, 1], [], []>} : vector<4x4xf32>, vector<4x256xf32>, vector<4x256xf32> -> vector<4x256xf32>
    %141 = arith.addf %129, %140 : vector<4x256xf32>
    %c4_68 = arith.constant 4 : index
    %c0_69 = arith.constant 0 : index
    %c0_70 = arith.constant 0 : index
    %142 = vector.load %arg4[%c4_68, %c0_69, %c0_70] : memref<9x4x4xf32, #tpu.memory_space<vmem>>, vector<1x4x4xf32>
    %143 = vector.shape_cast %142 : vector<1x4x4xf32> to vector<4x4xf32>
    %cst_71 = arith.constant dense<0.000000e+00> : vector<4x256xf32>
    %144 = tpu.matmul %143, %100, %cst_71 {dimension_numbers = #tpu.dot_dimension_numbers<[1], [0], [0], [1], [0, 0, 1, 1], [], []>} : vector<4x4xf32>, vector<4x256xf32>, vector<4x256xf32> -> vector<4x256xf32>
    %145 = arith.addf %141, %144 : vector<4x256xf32>
    %c7_72 = arith.constant 7 : index
    %c0_73 = arith.constant 0 : index
    %c0_74 = arith.constant 0 : index
    %146 = vector.load %arg4[%c7_72, %c0_73, %c0_74] : memref<9x4x4xf32, #tpu.memory_space<vmem>>, vector<1x4x4xf32>
    %147 = vector.shape_cast %146 : vector<1x4x4xf32> to vector<4x4xf32>
    %cst_75 = arith.constant dense<0.000000e+00> : vector<4x256xf32>
    %148 = tpu.matmul %147, %137, %cst_75 {dimension_numbers = #tpu.dot_dimension_numbers<[1], [0], [0], [1], [0, 0, 1, 1], [], []>} : vector<4x4xf32>, vector<4x256xf32>, vector<4x256xf32> -> vector<4x256xf32>
    %149 = arith.addf %145, %148 : vector<4x256xf32>
    %c16_i32_76 = arith.constant 16 : i32
    %150 = tpu.dynamic_rotate %108 by %c16_i32_76 dim 1 : vector<4x256xf32>, i32 -> vector<4x256xf32>
    %c240_i32_77 = arith.constant 240 : i32
    %151 = tpu.dynamic_rotate %108 by %c240_i32_77 dim 1 : vector<4x256xf32>, i32 -> vector<4x256xf32>
    %152 = vector.shape_cast %24 : vector<1x256xi1> to vector<1x256xi1>
    %153 = vector.broadcast %152 : vector<1x256xi1> to vector<4x256xi1>
    %154 = arith.select %153, %151, %150 : vector<4x256xi1>, vector<4x256xf32>
    %155 = vector.shape_cast %26 : vector<1x256xi1> to vector<1x256xi1>
    %156 = vector.broadcast %155 : vector<1x256xi1> to vector<4x256xi1>
    %157 = arith.select %156, %150, %151 : vector<4x256xi1>, vector<4x256xf32>
    %c2_78 = arith.constant 2 : index
    %c0_79 = arith.constant 0 : index
    %c0_80 = arith.constant 0 : index
    %158 = vector.load %arg4[%c2_78, %c0_79, %c0_80] : memref<9x4x4xf32, #tpu.memory_space<vmem>>, vector<1x4x4xf32>
    %159 = vector.shape_cast %158 : vector<1x4x4xf32> to vector<4x4xf32>
    %cst_81 = arith.constant dense<0.000000e+00> : vector<4x256xf32>
    %160 = tpu.matmul %159, %154, %cst_81 {dimension_numbers = #tpu.dot_dimension_numbers<[1], [0], [0], [1], [0, 0, 1, 1], [], []>} : vector<4x4xf32>, vector<4x256xf32>, vector<4x256xf32> -> vector<4x256xf32>
    %161 = arith.addf %149, %160 : vector<4x256xf32>
    %c5_82 = arith.constant 5 : index
    %c0_83 = arith.constant 0 : index
    %c0_84 = arith.constant 0 : index
    %162 = vector.load %arg4[%c5_82, %c0_83, %c0_84] : memref<9x4x4xf32, #tpu.memory_space<vmem>>, vector<1x4x4xf32>
    %163 = vector.shape_cast %162 : vector<1x4x4xf32> to vector<4x4xf32>
    %cst_85 = arith.constant dense<0.000000e+00> : vector<4x256xf32>
    %164 = tpu.matmul %163, %108, %cst_85 {dimension_numbers = #tpu.dot_dimension_numbers<[1], [0], [0], [1], [0, 0, 1, 1], [], []>} : vector<4x4xf32>, vector<4x256xf32>, vector<4x256xf32> -> vector<4x256xf32>
    %165 = arith.addf %161, %164 : vector<4x256xf32>
    %c8_86 = arith.constant 8 : index
    %c0_87 = arith.constant 0 : index
    %c0_88 = arith.constant 0 : index
    %166 = vector.load %arg4[%c8_86, %c0_87, %c0_88] : memref<9x4x4xf32, #tpu.memory_space<vmem>>, vector<1x4x4xf32>
    %167 = vector.shape_cast %166 : vector<1x4x4xf32> to vector<4x4xf32>
    %cst_89 = arith.constant dense<0.000000e+00> : vector<4x256xf32>
    %168 = tpu.matmul %167, %157, %cst_89 {dimension_numbers = #tpu.dot_dimension_numbers<[1], [0], [0], [1], [0, 0, 1, 1], [], []>} : vector<4x4xf32>, vector<4x256xf32>, vector<4x256xf32> -> vector<4x256xf32>
    %169 = arith.addf %165, %168 : vector<4x256xf32>
    %c0_90 = arith.constant 0 : index
    %c0_91 = arith.constant 0 : index
    %170 = vector.load %arg5[%c0_90, %c0_91] : memref<4x1xf32, #tpu.memory_space<vmem>>, vector<4x1xf32>
    %171 = vector.broadcast %170 : vector<4x1xf32> to vector<4x256xf32>
    %172 = arith.addf %169, %171 : vector<4x256xf32>
    %173 = arith.addf %1, %172 : vector<4x256xf32>
    %c0_92 = arith.constant 0 : index
    %c0_93 = arith.constant 0 : index
    %c0_94 = arith.constant 0 : index
    %174 = vector.load %arg6[%c0_92, %c0_93, %c0_94] : memref<1x4x256xf32, #tpu.memory_space<vmem>>, vector<1x4x256xf32>
    %175 = vector.shape_cast %174 : vector<1x4x256xf32> to vector<4x256xf32>
    %176 = vector.shape_cast %173 : vector<4x256xf32> to vector<1x4x256xf32>
    tpu.vector_store %arg6[%c0_92, %c0_93, %c0_94], %176 {strides = array<i32>} : memref<1x4x256xf32, #tpu.memory_space<vmem>>, vector<1x4x256xf32>,
    return
  }
  func.func @transform_0(%arg0: i32) -> (i32, i32, i32) {
    %c0_i32 = arith.constant 0 : i32
    %c0_i32_0 = arith.constant 0 : i32
    %c0_i32_1 = arith.constant 0 : i32
    return %arg0, %c0_i32, %c0_i32_0 : i32, i32, i32
  }
  func.func @transform_1(%arg0: i32) -> (i32, i32, i32) {
    %c0_i32 = arith.constant 0 : i32
    %c0_i32_0 = arith.constant 0 : i32
    %c0_i32_1 = arith.constant 0 : i32
    %c0_i32_2 = arith.constant 0 : i32
    return %c0_i32, %c0_i32_0, %c0_i32_1 : i32, i32, i32
  }
  func.func @transform_2(%arg0: i32) -> (i32, i32) {
    %c0_i32 = arith.constant 0 : i32
    %c0_i32_0 = arith.constant 0 : i32
    %c0_i32_1 = arith.constant 0 : i32
    return %c0_i32, %c0_i32_0 : i32, i32
  }
  func.func @transform_3(%arg0: i32) -> (i32, i32, i32) {
    %c0_i32 = arith.constant 0 : i32
    %c0_i32_0 = arith.constant 0 : i32
    %c0_i32_1 = arith.constant 0 : i32
    %c0_i32_2 = arith.constant 0 : i32
    return %c0_i32, %c0_i32_0, %c0_i32_1 : i32, i32, i32
  }
  func.func @transform_4(%arg0: i32) -> (i32, i32) {
    %c0_i32 = arith.constant 0 : i32
    %c0_i32_0 = arith.constant 0 : i32
    %c0_i32_1 = arith.constant 0 : i32
    return %c0_i32, %c0_i32_0 : i32, i32
  }
  func.func @transform_5(%arg0: i32) -> (i32, i32, i32) {
    %c0_i32 = arith.constant 0 : i32
    %c0_i32_0 = arith.constant 0 : i32
    %c0_i32_1 = arith.constant 0 : i32
    return %arg0, %c0_i32, %c0_i32_0 : i32, i32, i32
  }
}

</mosaic_0001>

<llo_original>
// kernel: tpu_custom_call.1
$region0: #{tpu_custom_call.1}
  #allocation0 [shape = 'u32[]', space=smem, size = 0x4, offset = 0x4, fixed_abs, tag = 'smem constant byte address 0x4 - core index']
  #allocation1 [shape = 'u32[72,128]{1,0:T(1,128)}', space=vmem, size = 0x9000, scoped, tag = 'internal scratch']
  %s0 = inlined_call_operand.vmem [shape: f32[2,4,256], index: 0, kind: input, shape index: {}]
  %s1 = inlined_call_operand.vmem [shape: f32[9,4,4], index: 1, kind: input, shape index: {}]
  %s2 = inlined_call_operand.vmem [shape: f32[4,1], index: 2, kind: input, shape index: {}]
  %s3 = inlined_call_operand.vmem [shape: f32[9,4,4], index: 3, kind: input, shape index: {}]
  %s4 = inlined_call_operand.vmem [shape: f32[4,1], index: 4, kind: input, shape index: {}]
  %s5 = inlined_call_operand.hbm [shape: f32[2,4,256], index: 5, kind: output, shape index: {}]
  %s6 = sld [smem:[#allocation0]]
  $region53: #{tpu_custom_call.1} parent=0
    _
  %s8 = ssub.s32 1, %s6
  %s9 = scalar_select 0, %s8, %s6
  $region1: #{tpu_custom_call.1} parent=0
    #allocation2 [shape = 'u8[8192]{0}', space=vmem, size = 0x2000, scoped, tag = 'output window, operand 0']
    #allocation3 [shape = 's32[2]{0}', space=sflag, size = 0x8, scoped, tag = 'scoped memory for tpu_custom_call.1']
    %10 = vsyncpa [#allocation3], 0
    %s11 = scalar_lea.sflag [#allocation3], 1
    %12 = vsyncpa %s11, 0
    loop: start=0, step=1, limit=4
    $region2: #{tpu_custom_call.1} parent=1 // loop_pre_header
      _
    $region3: #{tpu_custom_call.1} parent=1 // loop_header
      %s14 = sphi 0, %s18
      %p15 = scmp.ge.s32.totalorder %s14, 4
      %s24 = sphi 0, %s26
      %s27 = sphi 0, %s24
      %s28 = sphi 0, %s27
      %s44 = sphi 0, %s28
      %s48 = sphi 0, %s48
      %s50 = sphi 0, %s48
      %s51 = sphi 0, %s50
      %s65 = sphi 0, %s51
      %s69 = sphi 0, %s69
      %s71 = sphi 0, %s69
      %s72 = sphi 0, %s71
      %s86 = sphi 0, %s72
      %s90 = sphi 0, %s90
      %s92 = sphi 0, %s90
      %s93 = sphi 0, %s92
      %s107 = sphi 0, %s93
      %s111 = sphi 0, %s111
      %s113 = sphi 0, %s111
      %s114 = sphi 0, %s113
      %s128 = sphi 0, %s114
      %s134 = sphi 0, %s136
      %s137 = sphi 0, %s134
      %s138 = sphi 0, %s137
      %s154 = sphi 0, %s138
    $region4: #{tpu_custom_call.1} parent=1 // loop_header_branch
      %17 = sbr.rel (%p15) target = $region8
    $region5: #{tpu_custom_call.1} parent=1 // loop_body
      %s19 = ssub.s32 %s14, 1
      %s20 = ssub.s32 %s14, 2
      %s21 = sadd.s32 %s14, 1
      %s22 = ssub.s32 %s14, %s21
      %p23 = scmp.eq.s32.totalorder %s22, 0
      %s25 = sadd.s32 %s24, 1
      %s26 = scalar_select %p23, %s24, %s25
      %p29 = pneg %p23
      %p30 = scmp.eq.s32.totalorder %s14, 1
      %p31 = por %p29, %p30
      %p32 = scmp.ne.s32.totalorder %s24, %s27
      %p33 = scmp.eq.s32.totalorder %s14, 0
      %p34 = por %p32, %p33
      %p35 = scmp.ne.s32.totalorder %s24, %s27
      %p36 = scmp.eq.s32.totalorder %s19, 1
      %p37 = por %p35, %p36
      %p38 = scmp.ne.s32.totalorder %s27, %s28
      %p39 = scmp.eq.s32.totalorder %s19, 0
      %p40 = por %p38, %p39
      %p41 = scmp.ne.s32.totalorder %s27, %s28
      %p42 = scmp.eq.s32.totalorder %s20, 1
      %p43 = por %p41, %p42
      %p45 = scmp.ne.s32.totalorder %s28, %s44
      %p46 = scmp.eq.s32.totalorder %s20, 0
      %p47 = por %p45, %p46
      %s49 = sadd.s32 %s48, 1
      %p52 = scmp.eq.s32.totalorder %s14, 1
      %p53 = scmp.ne.s32.totalorder %s48, %s50
      %p54 = scmp.eq.s32.totalorder %s14, 0
      %p55 = por %p53, %p54
      %p56 = scmp.ne.s32.totalorder %s48, %s50
      %p57 = scmp.eq.s32.totalorder %s19, 1
      %p58 = por %p56, %p57
      %p59 = scmp.ne.s32.totalorder %s50, %s51
      %p60 = scmp.eq.s32.totalorder %s19, 0
      %p61 = por %p59, %p60
      %p62 = scmp.ne.s32.totalorder %s50, %s51
      %p63 = scmp.eq.s32.totalorder %s20, 1
      %p64 = por %p62, %p63
      %p66 = scmp.ne.s32.totalorder %s51, %s65
      %p67 = scmp.eq.s32.totalorder %s20, 0
      %p68 = por %p66, %p67
      %s70 = sadd.s32 %s69, 1
      %p73 = scmp.eq.s32.totalorder %s14, 1
      %p74 = scmp.ne.s32.totalorder %s69, %s71
      %p75 = scmp.eq.s32.totalorder %s14, 0
      %p76 = por %p74, %p75
      %p77 = scmp.ne.s32.totalorder %s69, %s71
      %p78 = scmp.eq.s32.totalorder %s19, 1
      %p79 = por %p77, %p78
      %p80 = scmp.ne.s32.totalorder %s71, %s72
      %p81 = scmp.eq.s32.totalorder %s19, 0
      %p82 = por %p80, %p81
      %p83 = scmp.ne.s32.totalorder %s71, %s72
      %p84 = scmp.eq.s32.totalorder %s20, 1
      %p85 = por %p83, %p84
      %p87 = scmp.ne.s32.totalorder %s72, %s86
      %p88 = scmp.eq.s32.totalorder %s20, 0
      %p89 = por %p87, %p88
      %s91 = sadd.s32 %s90, 1
      %p94 = scmp.eq.s32.totalorder %s14, 1
      %p95 = scmp.ne.s32.totalorder %s90, %s92
      %p96 = scmp.eq.s32.totalorder %s14, 0
      %p97 = por %p95, %p96
      %p98 = scmp.ne.s32.totalorder %s90, %s92
      %p99 = scmp.eq.s32.totalorder %s19, 1
      %p100 = por %p98, %p99
      %p101 = scmp.ne.s32.totalorder %s92, %s93
      %p102 = scmp.eq.s32.totalorder %s19, 0
      %p103 = por %p101, %p102
      %p104 = scmp.ne.s32.totalorder %s92, %s93
      %p105 = scmp.eq.s32.totalorder %s20, 1
      %p106 = por %p104, %p105
      %p108 = scmp.ne.s32.totalorder %s93, %s107
      %p109 = scmp.eq.s32.totalorder %s20, 0
      %p110 = por %p108, %p109
      %s112 = sadd.s32 %s111, 1
      %p115 = scmp.eq.s32.totalorder %s14, 1
      %p116 = scmp.ne.s32.totalorder %s111, %s113
      %p117 = scmp.eq.s32.totalorder %s14, 0
      %p118 = por %p116, %p117
      %p119 = scmp.ne.s32.totalorder %s111, %s113
      %p120 = scmp.eq.s32.totalorder %s19, 1
      %p121 = por %p119, %p120
      %p122 = scmp.ne.s32.totalorder %s113, %s114
      %p123 = scmp.eq.s32.totalorder %s19, 0
      %p124 = por %p122, %p123
      %p125 = scmp.ne.s32.totalorder %s113, %s114
      %p126 = scmp.eq.s32.totalorder %s20, 1
      %p127 = por %p125, %p126
      %p129 = scmp.ne.s32.totalorder %s114, %s128
      %p130 = scmp.eq.s32.totalorder %s20, 0
      %p131 = por %p129, %p130
      %s132 = ssub.s32 %s14, %s21
      %p133 = scmp.eq.s32.totalorder %s132, 0
      %s135 = sadd.s32 %s134, 1
      %s136 = scalar_select %p133, %s134, %s135
      %p139 = pneg %p133
      %p140 = scmp.eq.s32.totalorder %s14, 1
      %p141 = por %p139, %p140
      %p142 = scmp.ne.s32.totalorder %s134, %s137
      %p143 = scmp.eq.s32.totalorder %s14, 0
      %p144 = por %p142, %p143
      %p145 = scmp.ne.s32.totalorder %s134, %s137
      %p146 = scmp.eq.s32.totalorder %s19, 1
      %p147 = por %p145, %p146
      %p148 = scmp.ne.s32.totalorder %s137, %s138
      %p149 = scmp.eq.s32.totalorder %s19, 0
      %p150 = por %p148, %p149
      %p151 = scmp.ne.s32.totalorder %s137, %s138
      %p152 = scmp.eq.s32.totalorder %s20, 1
      %p153 = por %p151, %p152
      %p155 = scmp.ne.s32.totalorder %s138, %s154
      %p156 = scmp.eq.s32.totalorder %s20, 0
      %p157 = por %p155, %p156
      %p158 = scmp.le.s32.totalorder 1, %s14
      %p159 = scmp.lt.s32.totalorder %s14, 3
      %p160 = pnand %p158, %p159
      %p161 = pneg %p160
      // Predicated region
      $region9: #{tpu_custom_call.1} parent=5 // pred_check
        _
      $region10: #{tpu_custom_call.1} parent=5 // pred_check_branch
        %163 = sbr.rel (%p160) target = $region12
      $region11: #{tpu_custom_call.1} parent=5 // pred_region
        %s164 = ssub.s32 %s14, 1
        // Predicated region
        $region13: #{tpu_custom_call.1} parent=11 // pred_check
          %p165 = pneg %p61
        $region14: #{tpu_custom_call.1} parent=11 // pred_check_branch
          %167 = sbr.rel (%p165) target = $region16
        $region15: #{tpu_custom_call.1} parent=11 // pred_region
          _
        $region16: #{tpu_custom_call.1} parent=11 // pred_fallthru
          _
        // Predicated region
        $region17: #{tpu_custom_call.1} parent=11 // pred_check
          %p168 = pneg %p82
        $region18: #{tpu_custom_call.1} parent=11 // pred_check_branch
          %170 = sbr.rel (%p168) target = $region20
        $region19: #{tpu_custom_call.1} parent=11 // pred_region
          _
        $region20: #{tpu_custom_call.1} parent=11 // pred_fallthru
          _
        // Predicated region
        $region21: #{tpu_custom_call.1} parent=11 // pred_check
          %p171 = pneg %p103
        $region22: #{tpu_custom_call.1} parent=11 // pred_check_branch
          %173 = sbr.rel (%p171) target = $region24
        $region23: #{tpu_custom_call.1} parent=11 // pred_region
          _
        $region24: #{tpu_custom_call.1} parent=11 // pred_fallthru
          _
        // Predicated region
        $region25: #{tpu_custom_call.1} parent=11 // pred_check
          %p174 = pneg %p124
        $region26: #{tpu_custom_call.1} parent=11 // pred_check_branch
          %176 = sbr.rel (%p174) target = $region28
        $region27: #{tpu_custom_call.1} parent=11 // pred_region
          _
        $region28: #{tpu_custom_call.1} parent=11 // pred_fallthru
          _
      $region12: #{tpu_custom_call.1} parent=5 // pred_fallthru
        _
      %p177 = scmp.lt.s32.totalorder %s14, 2
      // Predicated region
      $region29: #{tpu_custom_call.1} parent=5 // pred_check
        %p178 = pneg %p177
      $region30: #{tpu_custom_call.1} parent=5 // pred_check_branch
        %180 = sbr.rel (%p178) target = $region32
      $region31: #{tpu_custom_call.1} parent=5 // pred_region
        // Predicated region
        $region33: #{tpu_custom_call.1} parent=31 // pred_check
          %p181 = pneg %p34
        $region34: #{tpu_custom_call.1} parent=31 // pred_check_branch
          %183 = sbr.rel (%p181) target = $region36
        $region35: #{tpu_custom_call.1} parent=31 // pred_region
          %p184 = scmp.lt.s32.totalorder %s14, 1
          %s185 = scalar_select %p184, %s14, 1
          %s186 = smul.addr %s185, 2
          %s187 = smul.addr %s186, 4
          %s188 = scalar_lea.vmem %s0, %s187
        $region36: #{tpu_custom_call.1} parent=31 // pred_fallthru
          _
      $region32: #{tpu_custom_call.1} parent=5 // pred_fallthru
        _
      %p189 = scmp.le.s32.totalorder 1, %s14
      %p190 = scmp.lt.s32.totalorder %s14, 3
      %p191 = pnand %p189, %p190
      %p192 = pneg %p191
      // Predicated region
      $region37: #{tpu_custom_call.1} parent=5 // pred_check
        _
      $region38: #{tpu_custom_call.1} parent=5 // pred_check_branch
        %194 = sbr.rel (%p191) target = $region40
      $region39: #{tpu_custom_call.1} parent=5 // pred_region
        %s195 = ssub.s32 %s14, 1
        %p196 = scmp.lt.s32.totalorder %s19, 1
        %s197 = scalar_select %p196, %s19, 1
        %s198 = smul.addr %s197, 2
        %s199 = smul.addr %s198, 4
        %s200 = scalar_lea.vmem %s0, %s199
        %p201 = pneg %p40
        %p202 = pneg %p37
        %p203 = pneg %p61
        %p204 = pneg %p58
        %p205 = pneg %p82
        %p206 = pneg %p79
        %p207 = pneg %p103
        %p208 = pneg %p100
        %p209 = pneg %p124
        %p210 = pneg %p121
        %p211 = pneg %p150
        %p212 = pneg %p147
        %s213 = sand.u32 %s137, 1
        %s214 = scalar_lea.sflag [#allocation3], %s213
        %s215 = sand.u32 %s137, 1
        %s216 = smul.addr %s215, 8
        %s217 = scalar_lea.vmem [#allocation2], %s216
        %p218 = scmp.lt.s32.totalorder %s19, 1
        %s219 = scalar_select %p218, %s19, 1
        %s220 = smul.addr %s219, 2
        %s221 = smul.addr %s220, 4
        %s222 = scalar_lea.vmem %s0, %s221
        %v223 = vld [vmem:[%s222] sm:$0xff]
        %v224 = vlaneseq
        %v225 = vand.u32 %v224, 127
        %v226 = vadd.s32 %v225, 128
        %vm227 = vcmp.lt.s32.totalorder %v225, 0
        %v228 = vsub.s32 0, %v225
        %v229 = vsel %vm227, %v228, %v225
        %v230 = vshrl.u32 %v229, 4
        %v231 = vand.u32 %v229, 15
        %v232 = vsub.s32 0, %v231
        %v233 = vsel %vm227, %v232, %v231
        %vm234 = vcmp.lt.s32.totalorder %v226, 0
        %v235 = vsub.s32 0, %v226
        %v236 = vsel %vm234, %v235, %v226
        %v237 = vshrl.u32 %v236, 4
        %v238 = vand.u32 %v236, 15
        %v239 = vsub.s32 0, %v238
        %v240 = vsel %vm234, %v239, %v238
        %vm241 = vcmp.ne.s32.totalorder %v233, 0
        %vm242 = vcmp.ne.s32.totalorder %v240, 0
        %vm243 = vcmp.lt.s32.totalorder %v233, 0
        %vm244 = vcmp.lt.s32.totalorder %v240, 0
        %vm245 = vmand %vm243, %vm241
        %vm246 = vmand %vm244, %vm242
        %v247 = vadd.s32 %v233, 16
        %v248 = vadd.s32 %v240, 16
        %v249 = vsel %vm245, %v247, %v233
        %v250 = vsel %vm246, %v248, %v240
        %vm251 = vcmp.eq.s32.totalorder %v249, 0
        %vm252 = vcmp.eq.s32.totalorder %v250, 0
        %vm253 = vcmp.eq.s32.totalorder %v249, 15
        %vm254 = vcmp.eq.s32.totalorder %v250, 15
        %vm255 = vcmp.lt.s32.totalorder %v225, 16
        %vm256 = vcmp.lt.s32.totalorder %v226, 16
        %vm257 = vcmp.ge.s32.totalorder %v225, 240
        %vm258 = vcmp.ge.s32.totalorder %v226, 240
        %260 = vst [vmem:[#allocation1] ss:$2 sm:$0xff] %v223
        %v261 = vld.sshfl [vmem:[#allocation1] sm:$0xff pattern:$0x75316420]
        %v262 = vld.sshfl [vmem:[#allocation1 + $0x8] sm:$0xff pattern:$0x75316420]
        %265 = vrot.lane.b32.xlu0 %v261, 1
        %v266 = vpop.permute.xlu0 %265
        %267 = vrot.lane.b32.xlu0 %v262, 1
        %v268 = vpop.permute.xlu0 %267
        %vm269 = vcmp.lt.s32.totalorder %v225, 1
        %v270 = vsel %vm269, %v266, %v268
        %v271 = vsel %vm269, %v268, %v266
        %272 = vst [vmem:[#allocation1] ss:$2 sm:$0xff] %v223
        %v273 = vld.sshfl [vmem:[#allocation1] sm:$0xff pattern:$0x75316420]
        %v274 = vld.sshfl [vmem:[#allocation1 + $0x8] sm:$0xff pattern:$0x75316420]
        %277 = vrot.lane.b32.xlu0 %v273, 127
        %v278 = vpop.permute.xlu0 %277
        %279 = vrot.lane.b32.xlu0 %v274, 127
        %v280 = vpop.permute.xlu0 %279
        %vm281 = vcmp.lt.s32.totalorder %v225, 127
        %v282 = vsel %vm281, %v278, %v280
        %v283 = vsel %vm281, %v280, %v278
        %v284 = vsel %vm251, 1, 0
        %v285 = vsel %vm252, 1, 0
        %vm286 = vcmp.eq.s32.totalorder %v284, 1
        %vm287 = vcmp.eq.s32.totalorder %v285, 1
        %v288 = vsel %vm286, %v282, %v271
        %v289 = vsel %vm287, %v283, %v270
        %v290 = vsel %vm253, 1, 0
        %v291 = vsel %vm254, 1, 0
        %vm292 = vcmp.eq.s32.totalorder %v290, 1
        %vm293 = vcmp.eq.s32.totalorder %v291, 1
        %v294 = vsel %vm292, %v271, %v282
        %v295 = vsel %vm293, %v270, %v283
        %296 = vrot.lane.b32.xlu0 %v288, 16
        %v297 = vpop.permute.xlu0 %296
        %298 = vrot.lane.b32.xlu0 %v289, 16
        %v299 = vpop.permute.xlu0 %298
        %v300 = vsel %vm255, %v297, %v299
        %v301 = vsel %vm255, %v299, %v297
        %302 = vrot.lane.b32.xlu0 %v288, 112
        %v303 = vpop.permute.xlu0 %302
        %304 = vrot.lane.b32.xlu0 %v289, 112
        %v305 = vpop.permute.xlu0 %304
        %vm306 = vcmp.lt.s32.totalorder %v225, 112
        %v307 = vsel %vm306, %v303, %v305
        %v308 = vsel %vm306, %v305, %v303
        %v309 = vsel %vm255, 1, 0
        %v310 = vsel %vm256, 1, 0
        %vm311 = vcmp.eq.s32.totalorder %v309, 1
        %vm312 = vcmp.eq.s32.totalorder %v310, 1
        %v313 = vsel %vm311, %v307, %v301
        %v314 = vsel %vm312, %v308, %v300
        %v315 = vsel %vm257, 1, 0
        %v316 = vsel %vm258, 1, 0
        %vm317 = vcmp.eq.s32.totalorder %v315, 1
        %vm318 = vcmp.eq.s32.totalorder %v316, 1
        %v319 = vsel %vm317, %v301, %v307
        %v320 = vsel %vm318, %v300, %v308
        %v321 = vld [vmem:[%s1] sm:$0xf]
        %s322 = scalar_lea.vmem %s1, 12
        %v323 = vld [vmem:[%s322] sm:$0xf]
        %vm324 = vcmask 31744
        %v326 = vsel %vm324, %v323, 0
        %vm328 = vcmask 1043456
        %v330 = vsel %vm328, %v288, 0
        %v333 = vsel %vm328, %v289, 0
        %335 = vmatpush.msra.mxu0 0.0
        %336 = vmatpush.msra.mxu0 0.0
        %337 = vmatpush.msra.mxu0 0.0
        %338 = vmatpush.msra.mxu0 0.0
        %339 = vmatpush.msra.mxu0 0.0
        %340 = vmatpush.msra.mxu0 0.0
        %341 = vmatpush.msra.mxu0 0.0
        %342 = vmatpush.msra.mxu0 0.0
        %343 = vmatpush.msra.mxu0 0.0
        %344 = vmatpush.msra.mxu0 0.0
        %345 = vmatpush.msra.mxu0 0.0
        %346 = vmatpush.msra.mxu0 0.0
        %347 = vmatpush.msra.mxu0 0.0
        %348 = vmatpush.msra.mxu0 0.0
        %349 = vmatpush.msra.mxu0 0.0
        %350 = vmatpush.msra.mxu0 %v330
        %351 = vmatmul.f32.gmra.mxu0 %v326
        %v352 = vpop.f32.mrf.mxu0
        %v353 = vadd.f32 0.0, %v352
        %354 = vdwg.mxu0
        %355 = vmatpush.msra.mxu0 0.0
        %356 = vmatpush.msra.mxu0 0.0
        %357 = vmatpush.msra.mxu0 0.0
        %358 = vmatpush.msra.mxu0 0.0
        %359 = vmatpush.msra.mxu0 0.0
        %360 = vmatpush.msra.mxu0 0.0
        %361 = vmatpush.msra.mxu0 0.0
        %362 = vmatpush.msra.mxu0 0.0
        %363 = vmatpush.msra.mxu0 0.0
        %364 = vmatpush.msra.mxu0 0.0
        %365 = vmatpush.msra.mxu0 0.0
        %366 = vmatpush.msra.mxu0 0.0
        %367 = vmatpush.msra.mxu0 0.0
        %368 = vmatpush.msra.mxu0 0.0
        %369 = vmatpush.msra.mxu0 0.0
        %370 = vmatpush.msra.mxu0 %v333
        %371 = vmatmul.f32.gmra.mxu0 %v326
        %v372 = vpop.f32.mrf.mxu0
        %v373 = vadd.f32 0.0, %v372
        %374 = vdwg.mxu0
        %v376 = vsel %vm324, %v321, 0
        %v379 = vsel %vm328, %v313, 0
        %v382 = vsel %vm328, %v314, 0
        %384 = vmatpush.msra.mxu0 0.0
        %385 = vmatpush.msra.mxu0 0.0
        %386 = vmatpush.msra.mxu0 0.0
        %387 = vmatpush.msra.mxu0 0.0
        %388 = vmatpush.msra.mxu0 0.0
        %389 = vmatpush.msra.mxu0 0.0
        %390 = vmatpush.msra.mxu0 0.0
        %391 = vmatpush.msra.mxu0 0.0
        %392 = vmatpush.msra.mxu0 0.0
        %393 = vmatpush.msra.mxu0 0.0
        %394 = vmatpush.msra.mxu0 0.0
        %395 = vmatpush.msra.mxu0 0.0
        %396 = vmatpush.msra.mxu0 0.0
        %397 = vmatpush.msra.mxu0 0.0
        %398 = vmatpush.msra.mxu0 0.0
        %399 = vmatpush.msra.mxu0 %v379
        %400 = vmatmul.f32.gmra.mxu0 %v376
        %v401 = vpop.f32.mrf.mxu0
        %v402 = vadd.f32 %v353, %v401
        %403 = vdwg.mxu0
        %404 = vmatpush.msra.mxu0 0.0
        %405 = vmatpush.msra.mxu0 0.0
        %406 = vmatpush.msra.mxu0 0.0
        %407 = vmatpush.msra.mxu0 0.0
        %408 = vmatpush.msra.mxu0 0.0
        %409 = vmatpush.msra.mxu0 0.0
        %410 = vmatpush.msra.mxu0 0.0
        %411 = vmatpush.msra.mxu0 0.0
        %412 = vmatpush.msra.mxu0 0.0
        %413 = vmatpush.msra.mxu0 0.0
        %414 = vmatpush.msra.mxu0 0.0
        %415 = vmatpush.msra.mxu0 0.0
        %416 = vmatpush.msra.mxu0 0.0
        %417 = vmatpush.msra.mxu0 0.0
        %418 = vmatpush.msra.mxu0 0.0
        %419 = vmatpush.msra.mxu0 %v382
        %420 = vmatmul.f32.gmra.mxu0 %v376
        %v421 = vpop.f32.mrf.mxu0
        %v422 = vadd.f32 %v373, %v421
        %423 = vdwg.mxu0
        %s424 = scalar_lea.vmem %s1, 24
        %v425 = vld [vmem:[%s424] sm:$0xf]
        %v427 = vsel %vm324, %v425, 0
        %v430 = vsel %vm328, %v319, 0
        %v433 = vsel %vm328, %v320, 0
        %435 = vmatpush.msra.mxu0 0.0
        %436 = vmatpush.msra.mxu0 0.0
        %437 = vmatpush.msra.mxu0 0.0
        %438 = vmatpush.msra.mxu0 0.0
        %439 = vmatpush.msra.mxu0 0.0
        %440 = vmatpush.msra.mxu0 0.0
        %441 = vmatpush.msra.mxu0 0.0
        %442 = vmatpush.msra.mxu0 0.0
        %443 = vmatpush.msra.mxu0 0.0
        %444 = vmatpush.msra.mxu0 0.0
        %445 = vmatpush.msra.mxu0 0.0
        %446 = vmatpush.msra.mxu0 0.0
        %447 = vmatpush.msra.mxu0 0.0
        %448 = vmatpush.msra.mxu0 0.0
        %449 = vmatpush.msra.mxu0 0.0
        %450 = vmatpush.msra.mxu0 %v430
        %451 = vmatmul.f32.gmra.mxu0 %v427
        %v452 = vpop.f32.mrf.mxu0
        %v453 = vadd.f32 0.0, %v452
        %454 = vdwg.mxu0
        %455 = vmatpush.msra.mxu0 0.0
        %456 = vmatpush.msra.mxu0 0.0
        %457 = vmatpush.msra.mxu0 0.0
        %458 = vmatpush.msra.mxu0 0.0
        %459 = vmatpush.msra.mxu0 0.0
        %460 = vmatpush.msra.mxu0 0.0
        %461 = vmatpush.msra.mxu0 0.0
        %462 = vmatpush.msra.mxu0 0.0
        %463 = vmatpush.msra.mxu0 0.0
        %464 = vmatpush.msra.mxu0 0.0
        %465 = vmatpush.msra.mxu0 0.0
        %466 = vmatpush.msra.mxu0 0.0
        %467 = vmatpush.msra.mxu0 0.0
        %468 = vmatpush.msra.mxu0 0.0
        %469 = vmatpush.msra.mxu0 0.0
        %470 = vmatpush.msra.mxu0 %v433
        %471 = vmatmul.f32.gmra.mxu0 %v427
        %v472 = vpop.f32.mrf.mxu0
        %v473 = vadd.f32 0.0, %v472
        %474 = vdwg.mxu0
        %v475 = vadd.f32 %v402, %v453
        %v476 = vadd.f32 %v422, %v473
        %477 = vst [vmem:[#allocation1] ss:$2 sm:$0xff] %v223
        %v478 = vld.sshfl [vmem:[#allocation1] sm:$0xff pattern:$0x75316420]
        %v479 = vld.sshfl [vmem:[#allocation1 + $0x8] sm:$0xff pattern:$0x75316420]
        %482 = vrot.lane.b32.xlu0 %v478, 16
        %v483 = vpop.permute.xlu0 %482
        %484 = vrot.lane.b32.xlu0 %v479, 16
        %v485 = vpop.permute.xlu0 %484
        %v486 = vsel %vm255, %v483, %v485
        %v487 = vsel %vm255, %v485, %v483
        %488 = vst [vmem:[#allocation1] ss:$2 sm:$0xff] %v223
        %v489 = vld.sshfl [vmem:[#allocation1] sm:$0xff pattern:$0x75316420]
        %v490 = vld.sshfl [vmem:[#allocation1 + $0x8] sm:$0xff pattern:$0x75316420]
        %493 = vrot.lane.b32.xlu0 %v489, 112
        %v494 = vpop.permute.xlu0 %493
        %495 = vrot.lane.b32.xlu0 %v490, 112
        %v496 = vpop.permute.xlu0 %495
        %v497 = vsel %vm306, %v494, %v496
        %v498 = vsel %vm306, %v496, %v494
        %v499 = vsel %vm311, %v497, %v487
        %v500 = vsel %vm312, %v498, %v486
        %v501 = vsel %vm317, %v487, %v497
        %v502 = vsel %vm318, %v486, %v498
        %s503 = scalar_lea.vmem %s1, 4
        %v504 = vld [vmem:[%s503] sm:$0xf]
        %v506 = vsel %vm324, %v504, 0
        %v509 = vsel %vm328, %v499, 0
        %v512 = vsel %vm328, %v500, 0
        %514 = vmatpush.msra.mxu0 0.0
        %515 = vmatpush.msra.mxu0 0.0
        %516 = vmatpush.msra.mxu0 0.0
        %517 = vmatpush.msra.mxu0 0.0
        %518 = vmatpush.msra.mxu0 0.0
        %519 = vmatpush.msra.mxu0 0.0
        %520 = vmatpush.msra.mxu0 0.0
        %521 = vmatpush.msra.mxu0 0.0
        %522 = vmatpush.msra.mxu0 0.0
        %523 = vmatpush.msra.mxu0 0.0
        %524 = vmatpush.msra.mxu0 0.0
        %525 = vmatpush.msra.mxu0 0.0
        %526 = vmatpush.msra.mxu0 0.0
        %527 = vmatpush.msra.mxu0 0.0
        %528 = vmatpush.msra.mxu0 0.0
        %529 = vmatpush.msra.mxu0 %v509
        %530 = vmatmul.f32.gmra.mxu0 %v506
        %v531 = vpop.f32.mrf.mxu0
        %v532 = vadd.f32 0.0, %v531
        %533 = vdwg.mxu0
        %534 = vmatpush.msra.mxu0 0.0
        %535 = vmatpush.msra.mxu0 0.0
        %536 = vmatpush.msra.mxu0 0.0
        %537 = vmatpush.msra.mxu0 0.0
        %538 = vmatpush.msra.mxu0 0.0
        %539 = vmatpush.msra.mxu0 0.0
        %540 = vmatpush.msra.mxu0 0.0
        %541 = vmatpush.msra.mxu0 0.0
        %542 = vmatpush.msra.mxu0 0.0
        %543 = vmatpush.msra.mxu0 0.0
        %544 = vmatpush.msra.mxu0 0.0
        %545 = vmatpush.msra.mxu0 0.0
        %546 = vmatpush.msra.mxu0 0.0
        %547 = vmatpush.msra.mxu0 0.0
        %548 = vmatpush.msra.mxu0 0.0
        %549 = vmatpush.msra.mxu0 %v512
        %550 = vmatmul.f32.gmra.mxu0 %v506
        %v551 = vpop.f32.mrf.mxu0
        %v552 = vadd.f32 0.0, %v551
        %553 = vdwg.mxu0
        %v554 = vadd.f32 %v475, %v532
        %v555 = vadd.f32 %v476, %v552
        %s556 = scalar_lea.vmem %s1, 16
        %v557 = vld [vmem:[%s556] sm:$0xf]
        %558 = vst [vmem:[#allocation1] ss:$2 sm:$0xff] %v223
        %v559 = vld.sshfl [vmem:[#allocation1] sm:$0xff pattern:$0x75316420]
        %v560 = vld.sshfl [vmem:[#allocation1 + $0x8] sm:$0xff pattern:$0x75316420]
        %v562 = vsel %vm324, %v557, 0
        %v564 = vsel %vm328, %v559, 0
        %v566 = vsel %vm328, %v560, 0
        %568 = vmatpush.msra.mxu0 0.0
        %569 = vmatpush.msra.mxu0 0.0
        %570 = vmatpush.msra.mxu0 0.0
        %571 = vmatpush.msra.mxu0 0.0
        %572 = vmatpush.msra.mxu0 0.0
        %573 = vmatpush.msra.mxu0 0.0
        %574 = vmatpush.msra.mxu0 0.0
        %575 = vmatpush.msra.mxu0 0.0
        %576 = vmatpush.msra.mxu0 0.0
        %577 = vmatpush.msra.mxu0 0.0
        %578 = vmatpush.msra.mxu0 0.0
        %579 = vmatpush.msra.mxu0 0.0
        %580 = vmatpush.msra.mxu0 0.0
        %581 = vmatpush.msra.mxu0 0.0
        %582 = vmatpush.msra.mxu0 0.0
        %583 = vmatpush.msra.mxu0 %v564
        %584 = vmatmul.f32.gmra.mxu0 %v562
        %v585 = vpop.f32.mrf.mxu0
        %v586 = vadd.f32 0.0, %v585
        %587 = vdwg.mxu0
        %588 = vmatpush.msra.mxu0 0.0
        %589 = vmatpush.msra.mxu0 0.0
        %590 = vmatpush.msra.mxu0 0.0
        %591 = vmatpush.msra.mxu0 0.0
        %592 = vmatpush.msra.mxu0 0.0
        %593 = vmatpush.msra.mxu0 0.0
        %594 = vmatpush.msra.mxu0 0.0
        %595 = vmatpush.msra.mxu0 0.0
        %596 = vmatpush.msra.mxu0 0.0
        %597 = vmatpush.msra.mxu0 0.0
        %598 = vmatpush.msra.mxu0 0.0
        %599 = vmatpush.msra.mxu0 0.0
        %600 = vmatpush.msra.mxu0 0.0
        %601 = vmatpush.msra.mxu0 0.0
        %602 = vmatpush.msra.mxu0 0.0
        %603 = vmatpush.msra.mxu0 %v566
        %604 = vmatmul.f32.gmra.mxu0 %v562
        %v605 = vpop.f32.mrf.mxu0
        %v606 = vadd.f32 0.0, %v605
        %607 = vdwg.mxu0
        %v608 = vadd.f32 %v554, %v586
        %v609 = vadd.f32 %v555, %v606
        %s610 = scalar_lea.vmem %s1, 28
        %v611 = vld [vmem:[%s610] sm:$0xf]
        %v613 = vsel %vm324, %v611, 0
        %v616 = vsel %vm328, %v501, 0
        %v619 = vsel %vm328, %v502, 0
        %621 = vmatpush.msra.mxu0 0.0
        %622 = vmatpush.msra.mxu0 0.0
        %623 = vmatpush.msra.mxu0 0.0
        %624 = vmatpush.msra.mxu0 0.0
        %625 = vmatpush.msra.mxu0 0.0
        %626 = vmatpush.msra.mxu0 0.0
        %627 = vmatpush.msra.mxu0 0.0
        %628 = vmatpush.msra.mxu0 0.0
        %629 = vmatpush.msra.mxu0 0.0
        %630 = vmatpush.msra.mxu0 0.0
        %631 = vmatpush.msra.mxu0 0.0
        %632 = vmatpush.msra.mxu0 0.0
        %633 = vmatpush.msra.mxu0 0.0
        %634 = vmatpush.msra.mxu0 0.0
        %635 = vmatpush.msra.mxu0 0.0
        %636 = vmatpush.msra.mxu0 %v616
        %637 = vmatmul.f32.gmra.mxu0 %v613
        %v638 = vpop.f32.mrf.mxu0
        %v639 = vadd.f32 0.0, %v638
        %640 = vdwg.mxu0
        %641 = vmatpush.msra.mxu0 0.0
        %642 = vmatpush.msra.mxu0 0.0
        %643 = vmatpush.msra.mxu0 0.0
        %644 = vmatpush.msra.mxu0 0.0
        %645 = vmatpush.msra.mxu0 0.0
        %646 = vmatpush.msra.mxu0 0.0
        %647 = vmatpush.msra.mxu0 0.0
        %648 = vmatpush.msra.mxu0 0.0
        %649 = vmatpush.msra.mxu0 0.0
        %650 = vmatpush.msra.mxu0 0.0
        %651 = vmatpush.msra.mxu0 0.0
        %652 = vmatpush.msra.mxu0 0.0
        %653 = vmatpush.msra.mxu0 0.0
        %654 = vmatpush.msra.mxu0 0.0
        %655 = vmatpush.msra.mxu0 0.0
        %656 = vmatpush.msra.mxu0 %v619
        %657 = vmatmul.f32.gmra.mxu0 %v613
        %v658 = vpop.f32.mrf.mxu0
        %v659 = vadd.f32 0.0, %v658
        %660 = vdwg.mxu0
        %v661 = vadd.f32 %v608, %v639
        %v662 = vadd.f32 %v609, %v659
        %663 = vrot.lane.b32.xlu0 %v294, 16
        %v664 = vpop.permute.xlu0 %663
        %665 = vrot.lane.b32.xlu0 %v295, 16
        %v666 = vpop.permute.xlu0 %665
        %v667 = vsel %vm255, %v664, %v666
        %v668 = vsel %vm255, %v666, %v664
        %669 = vrot.lane.b32.xlu0 %v294, 112
        %v670 = vpop.permute.xlu0 %669
        %671 = vrot.lane.b32.xlu0 %v295, 112
        %v672 = vpop.permute.xlu0 %671
        %v673 = vsel %vm306, %v670, %v672
        %v674 = vsel %vm306, %v672, %v670
        %v675 = vsel %vm311, %v673, %v668
        %v676 = vsel %vm312, %v674, %v667
        %v677 = vsel %vm317, %v668, %v673
        %v678 = vsel %vm318, %v667, %v674
        %s679 = scalar_lea.vmem %s1, 8
        %v680 = vld [vmem:[%s679] sm:$0xf]
        %v682 = vsel %vm324, %v680, 0
        %v685 = vsel %vm328, %v675, 0
        %v688 = vsel %vm328, %v676, 0
        %690 = vmatpush.msra.mxu0 0.0
        %691 = vmatpush.msra.mxu0 0.0
        %692 = vmatpush.msra.mxu0 0.0
        %693 = vmatpush.msra.mxu0 0.0
        %694 = vmatpush.msra.mxu0 0.0
        %695 = vmatpush.msra.mxu0 0.0
        %696 = vmatpush.msra.mxu0 0.0
        %697 = vmatpush.msra.mxu0 0.0
        %698 = vmatpush.msra.mxu0 0.0
        %699 = vmatpush.msra.mxu0 0.0
        %700 = vmatpush.msra.mxu0 0.0
        %701 = vmatpush.msra.mxu0 0.0
        %702 = vmatpush.msra.mxu0 0.0
        %703 = vmatpush.msra.mxu0 0.0
        %704 = vmatpush.msra.mxu0 0.0
        %705 = vmatpush.msra.mxu0 %v685
        %706 = vmatmul.f32.gmra.mxu0 %v682
        %v707 = vpop.f32.mrf.mxu0
        %v708 = vadd.f32 0.0, %v707
        %709 = vdwg.mxu0
        %710 = vmatpush.msra.mxu0 0.0
        %711 = vmatpush.msra.mxu0 0.0
        %712 = vmatpush.msra.mxu0 0.0
        %713 = vmatpush.msra.mxu0 0.0
        %714 = vmatpush.msra.mxu0 0.0
        %715 = vmatpush.msra.mxu0 0.0
        %716 = vmatpush.msra.mxu0 0.0
        %717 = vmatpush.msra.mxu0 0.0
        %718 = vmatpush.msra.mxu0 0.0
        %719 = vmatpush.msra.mxu0 0.0
        %720 = vmatpush.msra.mxu0 0.0
        %721 = vmatpush.msra.mxu0 0.0
        %722 = vmatpush.msra.mxu0 0.0
        %723 = vmatpush.msra.mxu0 0.0
        %724 = vmatpush.msra.mxu0 0.0
        %725 = vmatpush.msra.mxu0 %v688
        %726 = vmatmul.f32.gmra.mxu0 %v682
        %v727 = vpop.f32.mrf.mxu0
        %v728 = vadd.f32 0.0, %v727
        %729 = vdwg.mxu0
        %v730 = vadd.f32 %v661, %v708
        %v731 = vadd.f32 %v662, %v728
        %s732 = scalar_lea.vmem %s1, 20
        %v733 = vld [vmem:[%s732] sm:$0xf]
        %v735 = vsel %vm324, %v733, 0
        %v738 = vsel %vm328, %v294, 0
        %v741 = vsel %vm328, %v295, 0
        %743 = vmatpush.msra.mxu0 0.0
        %744 = vmatpush.msra.mxu0 0.0
        %745 = vmatpush.msra.mxu0 0.0
        %746 = vmatpush.msra.mxu0 0.0
        %747 = vmatpush.msra.mxu0 0.0
        %748 = vmatpush.msra.mxu0 0.0
        %749 = vmatpush.msra.mxu0 0.0
        %750 = vmatpush.msra.mxu0 0.0
        %751 = vmatpush.msra.mxu0 0.0
        %752 = vmatpush.msra.mxu0 0.0
        %753 = vmatpush.msra.mxu0 0.0
        %754 = vmatpush.msra.mxu0 0.0
        %755 = vmatpush.msra.mxu0 0.0
        %756 = vmatpush.msra.mxu0 0.0
        %757 = vmatpush.msra.mxu0 0.0
        %758 = vmatpush.msra.mxu0 %v738
        %759 = vmatmul.f32.gmra.mxu0 %v735
        %v760 = vpop.f32.mrf.mxu0
        %v761 = vadd.f32 0.0, %v760
        %762 = vdwg.mxu0
        %763 = vmatpush.msra.mxu0 0.0
        %764 = vmatpush.msra.mxu0 0.0
        %765 = vmatpush.msra.mxu0 0.0
        %766 = vmatpush.msra.mxu0 0.0
        %767 = vmatpush.msra.mxu0 0.0
        %768 = vmatpush.msra.mxu0 0.0
        %769 = vmatpush.msra.mxu0 0.0
        %770 = vmatpush.msra.mxu0 0.0
        %771 = vmatpush.msra.mxu0 0.0
        %772 = vmatpush.msra.mxu0 0.0
        %773 = vmatpush.msra.mxu0 0.0
        %774 = vmatpush.msra.mxu0 0.0
        %775 = vmatpush.msra.mxu0 0.0
        %776 = vmatpush.msra.mxu0 0.0
        %777 = vmatpush.msra.mxu0 0.0
        %778 = vmatpush.msra.mxu0 %v741
        %779 = vmatmul.f32.gmra.mxu0 %v735
        %v780 = vpop.f32.mrf.mxu0
        %v781 = vadd.f32 0.0, %v780
        %782 = vdwg.mxu0
        %v783 = vadd.f32 %v730, %v761
        %v784 = vadd.f32 %v731, %v781
        %s785 = scalar_lea.vmem %s1, 32
        %v786 = vld [vmem:[%s785] sm:$0xf]
        %v788 = vsel %vm324, %v786, 0
        %v791 = vsel %vm328, %v677, 0
        %v794 = vsel %vm328, %v678, 0
        %796 = vmatpush.msra.mxu0 0.0
        %797 = vmatpush.msra.mxu0 0.0
        %798 = vmatpush.msra.mxu0 0.0
        %799 = vmatpush.msra.mxu0 0.0
        %800 = vmatpush.msra.mxu0 0.0
        %801 = vmatpush.msra.mxu0 0.0
        %802 = vmatpush.msra.mxu0 0.0
        %803 = vmatpush.msra.mxu0 0.0
        %804 = vmatpush.msra.mxu0 0.0
        %805 = vmatpush.msra.mxu0 0.0
        %806 = vmatpush.msra.mxu0 0.0
        %807 = vmatpush.msra.mxu0 0.0
        %808 = vmatpush.msra.mxu0 0.0
        %809 = vmatpush.msra.mxu0 0.0
        %810 = vmatpush.msra.mxu0 0.0
        %811 = vmatpush.msra.mxu0 %v791
        %812 = vmatmul.f32.gmra.mxu0 %v788
        %v813 = vpop.f32.mrf.mxu0
        %v814 = vadd.f32 0.0, %v813
        %815 = vdwg.mxu0
        %816 = vmatpush.msra.mxu0 0.0
        %817 = vmatpush.msra.mxu0 0.0
        %818 = vmatpush.msra.mxu0 0.0
        %819 = vmatpush.msra.mxu0 0.0
        %820 = vmatpush.msra.mxu0 0.0
        %821 = vmatpush.msra.mxu0 0.0
        %822 = vmatpush.msra.mxu0 0.0
        %823 = vmatpush.msra.mxu0 0.0
        %824 = vmatpush.msra.mxu0 0.0
        %825 = vmatpush.msra.mxu0 0.0
        %826 = vmatpush.msra.mxu0 0.0
        %827 = vmatpush.msra.mxu0 0.0
        %828 = vmatpush.msra.mxu0 0.0
        %829 = vmatpush.msra.mxu0 0.0
        %830 = vmatpush.msra.mxu0 0.0
        %831 = vmatpush.msra.mxu0 %v794
        %832 = vmatmul.f32.gmra.mxu0 %v788
        %v833 = vpop.f32.mrf.mxu0
        %v834 = vadd.f32 0.0, %v833
        %835 = vdwg.mxu0
        %v836 = vadd.f32 %v783, %v814
        %v837 = vadd.f32 %v784, %v834
        %v838 = vld [vmem:[%s2] sm:$0xf]
        %840 = vset.pattern.permute.xlu0 0
        %841 = vperm.xlu0 %840, %v838
        %v842 = vpop.permute.xlu0 %841
        %v844 = vadd.f32 %v836, %v842
        %v845 = vadd.f32 %v837, %v842
        %v846 = vmax.f32 %v844, 0.0
        %v847 = vmax.f32 %v845, 0.0
        %848 = vrot.lane.b32.xlu0 %v846, 1
        %v849 = vpop.permute.xlu0 %848
        %850 = vrot.lane.b32.xlu0 %v847, 1
        %v851 = vpop.permute.xlu0 %850
        %v852 = vsel %vm269, %v849, %v851
        %v853 = vsel %vm269, %v851, %v849
        %854 = vrot.lane.b32.xlu0 %v846, 127
        %v855 = vpop.permute.xlu0 %854
        %856 = vrot.lane.b32.xlu0 %v847, 127
        %v857 = vpop.permute.xlu0 %856
        %v858 = vsel %vm281, %v855, %v857
        %v859 = vsel %vm281, %v857, %v855
        %v860 = vsel %vm286, %v858, %v853
        %v861 = vsel %vm287, %v859, %v852
        %v862 = vsel %vm292, %v853, %v858
        %v863 = vsel %vm293, %v852, %v859
        %864 = vrot.lane.b32.xlu0 %v860, 16
        %v865 = vpop.permute.xlu0 %864
        %866 = vrot.lane.b32.xlu0 %v861, 16
        %v867 = vpop.permute.xlu0 %866
        %v868 = vsel %vm255, %v865, %v867
        %v869 = vsel %vm255, %v867, %v865
        %870 = vrot.lane.b32.xlu0 %v860, 112
        %v871 = vpop.permute.xlu0 %870
        %872 = vrot.lane.b32.xlu0 %v861, 112
        %v873 = vpop.permute.xlu0 %872
        %v874 = vsel %vm306, %v871, %v873
        %v875 = vsel %vm306, %v873, %v871
        %v876 = vsel %vm311, %v874, %v869
        %v877 = vsel %vm312, %v875, %v868
        %v878 = vsel %vm317, %v869, %v874
        %v879 = vsel %vm318, %v868, %v875
        %v880 = vld [vmem:[%s3] sm:$0xf]
        %s881 = scalar_lea.vmem %s3, 12
        %v882 = vld [vmem:[%s881] sm:$0xf]
        %v884 = vsel %vm324, %v882, 0
        %v887 = vsel %vm328, %v860, 0
        %v890 = vsel %vm328, %v861, 0
        %892 = vmatpush.msra.mxu0 0.0
        %893 = vmatpush.msra.mxu0 0.0
        %894 = vmatpush.msra.mxu0 0.0
        %895 = vmatpush.msra.mxu0 0.0
        %896 = vmatpush.msra.mxu0 0.0
        %897 = vmatpush.msra.mxu0 0.0
        %898 = vmatpush.msra.mxu0 0.0
        %899 = vmatpush.msra.mxu0 0.0
        %900 = vmatpush.msra.mxu0 0.0
        %901 = vmatpush.msra.mxu0 0.0
        %902 = vmatpush.msra.mxu0 0.0
        %903 = vmatpush.msra.mxu0 0.0
        %904 = vmatpush.msra.mxu0 0.0
        %905 = vmatpush.msra.mxu0 0.0
        %906 = vmatpush.msra.mxu0 0.0
        %907 = vmatpush.msra.mxu0 %v887
        %908 = vmatmul.f32.gmra.mxu0 %v884
        %v909 = vpop.f32.mrf.mxu0
        %v910 = vadd.f32 0.0, %v909
        %911 = vdwg.mxu0
        %912 = vmatpush.msra.mxu0 0.0
        %913 = vmatpush.msra.mxu0 0.0
        %914 = vmatpush.msra.mxu0 0.0
        %915 = vmatpush.msra.mxu0 0.0
        %916 = vmatpush.msra.mxu0 0.0
        %917 = vmatpush.msra.mxu0 0.0
        %918 = vmatpush.msra.mxu0 0.0
        %919 = vmatpush.msra.mxu0 0.0
        %920 = vmatpush.msra.mxu0 0.0
        %921 = vmatpush.msra.mxu0 0.0
        %922 = vmatpush.msra.mxu0 0.0
        %923 = vmatpush.msra.mxu0 0.0
        %924 = vmatpush.msra.mxu0 0.0
        %925 = vmatpush.msra.mxu0 0.0
        %926 = vmatpush.msra.mxu0 0.0
        %927 = vmatpush.msra.mxu0 %v890
        %928 = vmatmul.f32.gmra.mxu0 %v884
        %v929 = vpop.f32.mrf.mxu0
        %v930 = vadd.f32 0.0, %v929
        %931 = vdwg.mxu0
        %v933 = vsel %vm324, %v880, 0
        %v936 = vsel %vm328, %v876, 0
        %v939 = vsel %vm328, %v877, 0
        %941 = vmatpush.msra.mxu0 0.0
        %942 = vmatpush.msra.mxu0 0.0
        %943 = vmatpush.msra.mxu0 0.0
        %944 = vmatpush.msra.mxu0 0.0
        %945 = vmatpush.msra.mxu0 0.0
        %946 = vmatpush.msra.mxu0 0.0
        %947 = vmatpush.msra.mxu0 0.0
        %948 = vmatpush.msra.mxu0 0.0
        %949 = vmatpush.msra.mxu0 0.0
        %950 = vmatpush.msra.mxu0 0.0
        %951 = vmatpush.msra.mxu0 0.0
        %952 = vmatpush.msra.mxu0 0.0
        %953 = vmatpush.msra.mxu0 0.0
        %954 = vmatpush.msra.mxu0 0.0
        %955 = vmatpush.msra.mxu0 0.0
        %956 = vmatpush.msra.mxu0 %v936
        %957 = vmatmul.f32.gmra.mxu0 %v933
        %v958 = vpop.f32.mrf.mxu0
        %v959 = vadd.f32 %v910, %v958
        %960 = vdwg.mxu0
        %961 = vmatpush.msra.mxu0 0.0
        %962 = vmatpush.msra.mxu0 0.0
        %963 = vmatpush.msra.mxu0 0.0
        %964 = vmatpush.msra.mxu0 0.0
        %965 = vmatpush.msra.mxu0 0.0
        %966 = vmatpush.msra.mxu0 0.0
        %967 = vmatpush.msra.mxu0 0.0
        %968 = vmatpush.msra.mxu0 0.0
        %969 = vmatpush.msra.mxu0 0.0
        %970 = vmatpush.msra.mxu0 0.0
        %971 = vmatpush.msra.mxu0 0.0
        %972 = vmatpush.msra.mxu0 0.0
        %973 = vmatpush.msra.mxu0 0.0
        %974 = vmatpush.msra.mxu0 0.0
        %975 = vmatpush.msra.mxu0 0.0
        %976 = vmatpush.msra.mxu0 %v939
        %977 = vmatmul.f32.gmra.mxu0 %v933
        %v978 = vpop.f32.mrf.mxu0
        %v979 = vadd.f32 %v930, %v978
        %980 = vdwg.mxu0
        %s981 = scalar_lea.vmem %s3, 24
        %v982 = vld [vmem:[%s981] sm:$0xf]
        %v984 = vsel %vm324, %v982, 0
        %v987 = vsel %vm328, %v878, 0
        %v990 = vsel %vm328, %v879, 0
        %992 = vmatpush.msra.mxu0 0.0
        %993 = vmatpush.msra.mxu0 0.0
        %994 = vmatpush.msra.mxu0 0.0
        %995 = vmatpush.msra.mxu0 0.0
        %996 = vmatpush.msra.mxu0 0.0
        %997 = vmatpush.msra.mxu0 0.0
        %998 = vmatpush.msra.mxu0 0.0
        %999 = vmatpush.msra.mxu0 0.0
        %1000 = vmatpush.msra.mxu0 0.0
        %1001 = vmatpush.msra.mxu0 0.0
        %1002 = vmatpush.msra.mxu0 0.0
        %1003 = vmatpush.msra.mxu0 0.0
        %1004 = vmatpush.msra.mxu0 0.0
        %1005 = vmatpush.msra.mxu0 0.0
        %1006 = vmatpush.msra.mxu0 0.0
        %1007 = vmatpush.msra.mxu0 %v987
        %1008 = vmatmul.f32.gmra.mxu0 %v984
        %v1009 = vpop.f32.mrf.mxu0
        %v1010 = vadd.f32 0.0, %v1009
        %1011 = vdwg.mxu0
        %1012 = vmatpush.msra.mxu0 0.0
        %1013 = vmatpush.msra.mxu0 0.0
        %1014 = vmatpush.msra.mxu0 0.0
        %1015 = vmatpush.msra.mxu0 0.0
        %1016 = vmatpush.msra.mxu0 0.0
        %1017 = vmatpush.msra.mxu0 0.0
        %1018 = vmatpush.msra.mxu0 0.0
        %1019 = vmatpush.msra.mxu0 0.0
        %1020 = vmatpush.msra.mxu0 0.0
        %1021 = vmatpush.msra.mxu0 0.0
        %1022 = vmatpush.msra.mxu0 0.0
        %1023 = vmatpush.msra.mxu0 0.0
        %1024 = vmatpush.msra.mxu0 0.0
        %1025 = vmatpush.msra.mxu0 0.0
        %1026 = vmatpush.msra.mxu0 0.0
        %1027 = vmatpush.msra.mxu0 %v990
        %1028 = vmatmul.f32.gmra.mxu0 %v984
        %v1029 = vpop.f32.mrf.mxu0
        %v1030 = vadd.f32 0.0, %v1029
        %1031 = vdwg.mxu0
        %v1032 = vadd.f32 %v959, %v1010
        %v1033 = vadd.f32 %v979, %v1030
        %1034 = vrot.lane.b32.xlu0 %v846, 16
        %v1035 = vpop.permute.xlu0 %1034
        %1036 = vrot.lane.b32.xlu0 %v847, 16
        %v1037 = vpop.permute.xlu0 %1036
        %v1038 = vsel %vm255, %v1035, %v1037
        %v1039 = vsel %vm255, %v1037, %v1035
        %1040 = vrot.lane.b32.xlu0 %v846, 112
        %v1041 = vpop.permute.xlu0 %1040
        %1042 = vrot.lane.b32.xlu0 %v847, 112
        %v1043 = vpop.permute.xlu0 %1042
        %v1044 = vsel %vm306, %v1041, %v1043
        %v1045 = vsel %vm306, %v1043, %v1041
        %v1046 = vsel %vm311, %v1044, %v1039
        %v1047 = vsel %vm312, %v1045, %v1038
        %v1048 = vsel %vm317, %v1039, %v1044
        %v1049 = vsel %vm318, %v1038, %v1045
        %s1050 = scalar_lea.vmem %s3, 4
        %v1051 = vld [vmem:[%s1050] sm:$0xf]
        %v1053 = vsel %vm324, %v1051, 0
        %v1056 = vsel %vm328, %v1046, 0
        %v1059 = vsel %vm328, %v1047, 0
        %1061 = vmatpush.msra.mxu0 0.0
        %1062 = vmatpush.msra.mxu0 0.0
        %1063 = vmatpush.msra.mxu0 0.0
        %1064 = vmatpush.msra.mxu0 0.0
        %1065 = vmatpush.msra.mxu0 0.0
        %1066 = vmatpush.msra.mxu0 0.0
        %1067 = vmatpush.msra.mxu0 0.0
        %1068 = vmatpush.msra.mxu0 0.0
        %1069 = vmatpush.msra.mxu0 0.0
        %1070 = vmatpush.msra.mxu0 0.0
        %1071 = vmatpush.msra.mxu0 0.0
        %1072 = vmatpush.msra.mxu0 0.0
        %1073 = vmatpush.msra.mxu0 0.0
        %1074 = vmatpush.msra.mxu0 0.0
        %1075 = vmatpush.msra.mxu0 0.0
        %1076 = vmatpush.msra.mxu0 %v1056
        %1077 = vmatmul.f32.gmra.mxu0 %v1053
        %v1078 = vpop.f32.mrf.mxu0
        %v1079 = vadd.f32 0.0, %v1078
        %1080 = vdwg.mxu0
        %1081 = vmatpush.msra.mxu0 0.0
        %1082 = vmatpush.msra.mxu0 0.0
        %1083 = vmatpush.msra.mxu0 0.0
        %1084 = vmatpush.msra.mxu0 0.0
        %1085 = vmatpush.msra.mxu0 0.0
        %1086 = vmatpush.msra.mxu0 0.0
        %1087 = vmatpush.msra.mxu0 0.0
        %1088 = vmatpush.msra.mxu0 0.0
        %1089 = vmatpush.msra.mxu0 0.0
        %1090 = vmatpush.msra.mxu0 0.0
        %1091 = vmatpush.msra.mxu0 0.0
        %1092 = vmatpush.msra.mxu0 0.0
        %1093 = vmatpush.msra.mxu0 0.0
        %1094 = vmatpush.msra.mxu0 0.0
        %1095 = vmatpush.msra.mxu0 0.0
        %1096 = vmatpush.msra.mxu0 %v1059
        %1097 = vmatmul.f32.gmra.mxu0 %v1053
        %v1098 = vpop.f32.mrf.mxu0
        %v1099 = vadd.f32 0.0, %v1098
        %1100 = vdwg.mxu0
        %v1101 = vadd.f32 %v1032, %v1079
        %v1102 = vadd.f32 %v1033, %v1099
        %s1103 = scalar_lea.vmem %s3, 16
        %v1104 = vld [vmem:[%s1103] sm:$0xf]
        %v1106 = vsel %vm324, %v1104, 0
        %v1109 = vsel %vm328, %v846, 0
        %v1112 = vsel %vm328, %v847, 0
        %1114 = vmatpush.msra.mxu0 0.0
        %1115 = vmatpush.msra.mxu0 0.0
        %1116 = vmatpush.msra.mxu0 0.0
        %1117 = vmatpush.msra.mxu0 0.0
        %1118 = vmatpush.msra.mxu0 0.0
        %1119 = vmatpush.msra.mxu0 0.0
        %1120 = vmatpush.msra.mxu0 0.0
        %1121 = vmatpush.msra.mxu0 0.0
        %1122 = vmatpush.msra.mxu0 0.0
        %1123 = vmatpush.msra.mxu0 0.0
        %1124 = vmatpush.msra.mxu0 0.0
        %1125 = vmatpush.msra.mxu0 0.0
        %1126 = vmatpush.msra.mxu0 0.0
        %1127 = vmatpush.msra.mxu0 0.0
        %1128 = vmatpush.msra.mxu0 0.0
        %1129 = vmatpush.msra.mxu0 %v1109
        %1130 = vmatmul.f32.gmra.mxu0 %v1106
        %v1131 = vpop.f32.mrf.mxu0
        %v1132 = vadd.f32 0.0, %v1131
        %1133 = vdwg.mxu0
        %1134 = vmatpush.msra.mxu0 0.0
        %1135 = vmatpush.msra.mxu0 0.0
        %1136 = vmatpush.msra.mxu0 0.0
        %1137 = vmatpush.msra.mxu0 0.0
        %1138 = vmatpush.msra.mxu0 0.0
        %1139 = vmatpush.msra.mxu0 0.0
        %1140 = vmatpush.msra.mxu0 0.0
        %1141 = vmatpush.msra.mxu0 0.0
        %1142 = vmatpush.msra.mxu0 0.0
        %1143 = vmatpush.msra.mxu0 0.0
        %1144 = vmatpush.msra.mxu0 0.0
        %1145 = vmatpush.msra.mxu0 0.0
        %1146 = vmatpush.msra.mxu0 0.0
        %1147 = vmatpush.msra.mxu0 0.0
        %1148 = vmatpush.msra.mxu0 0.0
        %1149 = vmatpush.msra.mxu0 %v1112
        %1150 = vmatmul.f32.gmra.mxu0 %v1106
        %v1151 = vpop.f32.mrf.mxu0
        %v1152 = vadd.f32 0.0, %v1151
        %1153 = vdwg.mxu0
        %v1154 = vadd.f32 %v1101, %v1132
        %v1155 = vadd.f32 %v1102, %v1152
        %s1156 = scalar_lea.vmem %s3, 28
        %v1157 = vld [vmem:[%s1156] sm:$0xf]
        %v1159 = vsel %vm324, %v1157, 0
        %v1162 = vsel %vm328, %v1048, 0
        %v1165 = vsel %vm328, %v1049, 0
        %1167 = vmatpush.msra.mxu0 0.0
        %1168 = vmatpush.msra.mxu0 0.0
        %1169 = vmatpush.msra.mxu0 0.0
        %1170 = vmatpush.msra.mxu0 0.0
        %1171 = vmatpush.msra.mxu0 0.0
        %1172 = vmatpush.msra.mxu0 0.0
        %1173 = vmatpush.msra.mxu0 0.0
        %1174 = vmatpush.msra.mxu0 0.0
        %1175 = vmatpush.msra.mxu0 0.0
        %1176 = vmatpush.msra.mxu0 0.0
        %1177 = vmatpush.msra.mxu0 0.0
        %1178 = vmatpush.msra.mxu0 0.0
        %1179 = vmatpush.msra.mxu0 0.0
        %1180 = vmatpush.msra.mxu0 0.0
        %1181 = vmatpush.msra.mxu0 0.0
        %1182 = vmatpush.msra.mxu0 %v1162
        %1183 = vmatmul.f32.gmra.mxu0 %v1159
        %v1184 = vpop.f32.mrf.mxu0
        %v1185 = vadd.f32 0.0, %v1184
        %1186 = vdwg.mxu0
        %1187 = vmatpush.msra.mxu0 0.0
        %1188 = vmatpush.msra.mxu0 0.0
        %1189 = vmatpush.msra.mxu0 0.0
        %1190 = vmatpush.msra.mxu0 0.0
        %1191 = vmatpush.msra.mxu0 0.0
        %1192 = vmatpush.msra.mxu0 0.0
        %1193 = vmatpush.msra.mxu0 0.0
        %1194 = vmatpush.msra.mxu0 0.0
        %1195 = vmatpush.msra.mxu0 0.0
        %1196 = vmatpush.msra.mxu0 0.0
        %1197 = vmatpush.msra.mxu0 0.0
        %1198 = vmatpush.msra.mxu0 0.0
        %1199 = vmatpush.msra.mxu0 0.0
        %1200 = vmatpush.msra.mxu0 0.0
        %1201 = vmatpush.msra.mxu0 0.0
        %1202 = vmatpush.msra.mxu0 %v1165
        %1203 = vmatmul.f32.gmra.mxu0 %v1159
        %v1204 = vpop.f32.mrf.mxu0
        %v1205 = vadd.f32 0.0, %v1204
        %1206 = vdwg.mxu0
        %v1207 = vadd.f32 %v1154, %v1185
        %v1208 = vadd.f32 %v1155, %v1205
        %1209 = vrot.lane.b32.xlu0 %v862, 16
        %v1210 = vpop.permute.xlu0 %1209
        %1211 = vrot.lane.b32.xlu0 %v863, 16
        %v1212 = vpop.permute.xlu0 %1211
        %v1213 = vsel %vm255, %v1210, %v1212
        %v1214 = vsel %vm255, %v1212, %v1210
        %1215 = vrot.lane.b32.xlu0 %v862, 112
        %v1216 = vpop.permute.xlu0 %1215
        %1217 = vrot.lane.b32.xlu0 %v863, 112
        %v1218 = vpop.permute.xlu0 %1217
        %v1219 = vsel %vm306, %v1216, %v1218
        %v1220 = vsel %vm306, %v1218, %v1216
        %v1221 = vsel %vm311, %v1219, %v1214
        %v1222 = vsel %vm312, %v1220, %v1213
        %v1223 = vsel %vm317, %v1214, %v1219
        %v1224 = vsel %vm318, %v1213, %v1220
        %s1225 = scalar_lea.vmem %s3, 8
        %v1226 = vld [vmem:[%s1225] sm:$0xf]
        %v1228 = vsel %vm324, %v1226, 0
        %v1231 = vsel %vm328, %v1221, 0
        %v1234 = vsel %vm328, %v1222, 0
        %1236 = vmatpush.msra.mxu0 0.0
        %1237 = vmatpush.msra.mxu0 0.0
        %1238 = vmatpush.msra.mxu0 0.0
        %1239 = vmatpush.msra.mxu0 0.0
        %1240 = vmatpush.msra.mxu0 0.0
        %1241 = vmatpush.msra.mxu0 0.0
        %1242 = vmatpush.msra.mxu0 0.0
        %1243 = vmatpush.msra.mxu0 0.0
        %1244 = vmatpush.msra.mxu0 0.0
        %1245 = vmatpush.msra.mxu0 0.0
        %1246 = vmatpush.msra.mxu0 0.0
        %1247 = vmatpush.msra.mxu0 0.0
        %1248 = vmatpush.msra.mxu0 0.0
        %1249 = vmatpush.msra.mxu0 0.0
        %1250 = vmatpush.msra.mxu0 0.0
        %1251 = vmatpush.msra.mxu0 %v1231
        %1252 = vmatmul.f32.gmra.mxu0 %v1228
        %v1253 = vpop.f32.mrf.mxu0
        %v1254 = vadd.f32 0.0, %v1253
        %1255 = vdwg.mxu0
        %1256 = vmatpush.msra.mxu0 0.0
        %1257 = vmatpush.msra.mxu0 0.0
        %1258 = vmatpush.msra.mxu0 0.0
        %1259 = vmatpush.msra.mxu0 0.0
        %1260 = vmatpush.msra.mxu0 0.0
        %1261 = vmatpush.msra.mxu0 0.0
        %1262 = vmatpush.msra.mxu0 0.0
        %1263 = vmatpush.msra.mxu0 0.0
        %1264 = vmatpush.msra.mxu0 0.0
        %1265 = vmatpush.msra.mxu0 0.0
        %1266 = vmatpush.msra.mxu0 0.0
        %1267 = vmatpush.msra.mxu0 0.0
        %1268 = vmatpush.msra.mxu0 0.0
        %1269 = vmatpush.msra.mxu0 0.0
        %1270 = vmatpush.msra.mxu0 0.0
        %1271 = vmatpush.msra.mxu0 %v1234
        %1272 = vmatmul.f32.gmra.mxu0 %v1228
        %v1273 = vpop.f32.mrf.mxu0
        %v1274 = vadd.f32 0.0, %v1273
        %1275 = vdwg.mxu0
        %v1276 = vadd.f32 %v1207, %v1254
        %v1277 = vadd.f32 %v1208, %v1274
        %s1278 = scalar_lea.vmem %s3, 20
        %v1279 = vld [vmem:[%s1278] sm:$0xf]
        %v1281 = vsel %vm324, %v1279, 0
        %v1284 = vsel %vm328, %v862, 0
        %v1287 = vsel %vm328, %v863, 0
        %1289 = vmatpush.msra.mxu0 0.0
        %1290 = vmatpush.msra.mxu0 0.0
        %1291 = vmatpush.msra.mxu0 0.0
        %1292 = vmatpush.msra.mxu0 0.0
        %1293 = vmatpush.msra.mxu0 0.0
        %1294 = vmatpush.msra.mxu0 0.0
        %1295 = vmatpush.msra.mxu0 0.0
        %1296 = vmatpush.msra.mxu0 0.0
        %1297 = vmatpush.msra.mxu0 0.0
        %1298 = vmatpush.msra.mxu0 0.0
        %1299 = vmatpush.msra.mxu0 0.0
        %1300 = vmatpush.msra.mxu0 0.0
        %1301 = vmatpush.msra.mxu0 0.0
        %1302 = vmatpush.msra.mxu0 0.0
        %1303 = vmatpush.msra.mxu0 0.0
        %1304 = vmatpush.msra.mxu0 %v1284
        %1305 = vmatmul.f32.gmra.mxu0 %v1281
        %v1306 = vpop.f32.mrf.mxu0
        %v1307 = vadd.f32 0.0, %v1306
        %1308 = vdwg.mxu0
        %1309 = vmatpush.msra.mxu0 0.0
        %1310 = vmatpush.msra.mxu0 0.0
        %1311 = vmatpush.msra.mxu0 0.0
        %1312 = vmatpush.msra.mxu0 0.0
        %1313 = vmatpush.msra.mxu0 0.0
        %1314 = vmatpush.msra.mxu0 0.0
        %1315 = vmatpush.msra.mxu0 0.0
        %1316 = vmatpush.msra.mxu0 0.0
        %1317 = vmatpush.msra.mxu0 0.0
        %1318 = vmatpush.msra.mxu0 0.0
        %1319 = vmatpush.msra.mxu0 0.0
        %1320 = vmatpush.msra.mxu0 0.0
        %1321 = vmatpush.msra.mxu0 0.0
        %1322 = vmatpush.msra.mxu0 0.0
        %1323 = vmatpush.msra.mxu0 0.0
        %1324 = vmatpush.msra.mxu0 %v1287
        %1325 = vmatmul.f32.gmra.mxu0 %v1281
        %v1326 = vpop.f32.mrf.mxu0
        %v1327 = vadd.f32 0.0, %v1326
        %1328 = vdwg.mxu0
        %v1329 = vadd.f32 %v1276, %v1307
        %v1330 = vadd.f32 %v1277, %v1327
        %s1331 = scalar_lea.vmem %s3, 32
        %v1332 = vld [vmem:[%s1331] sm:$0xf]
        %v1334 = vsel %vm324, %v1332, 0
        %v1337 = vsel %vm328, %v1223, 0
        %v1340 = vsel %vm328, %v1224, 0
        %1342 = vmatpush.msra.mxu0 0.0
        %1343 = vmatpush.msra.mxu0 0.0
        %1344 = vmatpush.msra.mxu0 0.0
        %1345 = vmatpush.msra.mxu0 0.0
        %1346 = vmatpush.msra.mxu0 0.0
        %1347 = vmatpush.msra.mxu0 0.0
        %1348 = vmatpush.msra.mxu0 0.0
        %1349 = vmatpush.msra.mxu0 0.0
        %1350 = vmatpush.msra.mxu0 0.0
        %1351 = vmatpush.msra.mxu0 0.0
        %1352 = vmatpush.msra.mxu0 0.0
        %1353 = vmatpush.msra.mxu0 0.0
        %1354 = vmatpush.msra.mxu0 0.0
        %1355 = vmatpush.msra.mxu0 0.0
        %1356 = vmatpush.msra.mxu0 0.0
        %1357 = vmatpush.msra.mxu0 %v1337
        %1358 = vmatmul.f32.gmra.mxu0 %v1334
        %v1359 = vpop.f32.mrf.mxu0
        %v1360 = vadd.f32 0.0, %v1359
        %1361 = vdwg.mxu0
        %1362 = vmatpush.msra.mxu0 0.0
        %1363 = vmatpush.msra.mxu0 0.0
        %1364 = vmatpush.msra.mxu0 0.0
        %1365 = vmatpush.msra.mxu0 0.0
        %1366 = vmatpush.msra.mxu0 0.0
        %1367 = vmatpush.msra.mxu0 0.0
        %1368 = vmatpush.msra.mxu0 0.0
        %1369 = vmatpush.msra.mxu0 0.0
        %1370 = vmatpush.msra.mxu0 0.0
        %1371 = vmatpush.msra.mxu0 0.0
        %1372 = vmatpush.msra.mxu0 0.0
        %1373 = vmatpush.msra.mxu0 0.0
        %1374 = vmatpush.msra.mxu0 0.0
        %1375 = vmatpush.msra.mxu0 0.0
        %1376 = vmatpush.msra.mxu0 0.0
        %1377 = vmatpush.msra.mxu0 %v1340
        %1378 = vmatmul.f32.gmra.mxu0 %v1334
        %v1379 = vpop.f32.mrf.mxu0
        %v1380 = vadd.f32 0.0, %v1379
        %1381 = vdwg.mxu0
        %v1382 = vadd.f32 %v1329, %v1360
        %v1383 = vadd.f32 %v1330, %v1380
        %v1384 = vld [vmem:[%s4] sm:$0xf]
        %1386 = vset.pattern.permute.xlu0 0
        %1387 = vperm.xlu0 %1386, %v1384
        %v1388 = vpop.permute.xlu0 %1387
        %v1390 = vadd.f32 %v1382, %v1388
        %v1391 = vadd.f32 %v1383, %v1388
        %v1394 = vrot.slane %v1391, 4
        %v1395 = vsel %vm328, %v1390, %v1394
        %v1397 = vadd.f32 %v223, %v1395
        %1398 = vst [vmem:[%s217] sm:$0xff] %v1397
        %s1399 = sand.u32 %s137, 1
        %s1400 = scalar_lea.sflag [#allocation3], %s1399
        %s1401 = sand.u32 %s137, 1
        %s1402 = smul.addr %s1401, 8
        %s1403 = scalar_lea.vmem [#allocation2], %s1402
        // Predicated region
        $region41: #{tpu_custom_call.1} parent=39 // pred_check
          %p1404 = pneg %p147
        $region42: #{tpu_custom_call.1} parent=39 // pred_check_branch
          %1406 = sbr.rel (%p1404) target = $region44
        $region43: #{tpu_custom_call.1} parent=39 // pred_region
          %1408 = vsyncadd %s1400, 0
          %s1409 = smul.addr %s19, 2
          %s1410 = smul.addr %s1409, 4
          %s1411 = scalar_lea.hbm %s5, %s1410
          %s1413 = sshll.u32 %s1403, 4
          %s1414 = int_to_ptr.vmem [resolvable:$true] %s1413
          %s1415 = sshll.u32 %s1411, 4
          %s1416 = int_to_ptr.hbm [resolvable:$true] %s1415
          %1418 = dma.vmem_to_hbm [thread:$0]  %s1414, 128, %s1416, %s1400
        $region44: #{tpu_custom_call.1} parent=39 // pred_fallthru
          _
      $region40: #{tpu_custom_call.1} parent=5 // pred_fallthru
        _
      %p1419 = scmp.le.s32.totalorder 2, %s14
      // Predicated region
      $region45: #{tpu_custom_call.1} parent=5 // pred_check
        %p1420 = pneg %p1419
      $region46: #{tpu_custom_call.1} parent=5 // pred_check_branch
        %1422 = sbr.rel (%p1420) target = $region48
      $region47: #{tpu_custom_call.1} parent=5 // pred_region
        %s1423 = ssub.s32 %s14, 2
        // Predicated region
        $region49: #{tpu_custom_call.1} parent=47 // pred_check
          %p1424 = pneg %p153
        $region50: #{tpu_custom_call.1} parent=47 // pred_check_branch
          %1426 = sbr.rel (%p1424) target = $region52
        $region51: #{tpu_custom_call.1} parent=47 // pred_region
          %s1427 = sand.u32 %s138, 1
          %s1428 = scalar_lea.sflag [#allocation3], %s1427
          %s1429 = sand.u32 %s138, 1
          %s1430 = smul.addr %s1429, 8
          %s1431 = scalar_lea.vmem [#allocation2], %s1430
          %1433 = dma.done %s1428, 128
        $region52: #{tpu_custom_call.1} parent=47 // pred_fallthru
          _
      $region48: #{tpu_custom_call.1} parent=5 // pred_fallthru
        _
    $region6: #{tpu_custom_call.1} parent=1 // loop_footer
      %s18 = sadd.s32 1, %s14
    $region7: #{tpu_custom_call.1} parent=1 // loop_footer_branch
      %13 = sbr.rel target = $region3
    $region8: #{tpu_custom_call.1} parent=1 // loop_exit
      _
    %1434 = vsyncpa [#allocation3], 1
    %s1435 = scalar_lea.sflag [#allocation3], 1
    %1436 = vsyncpa %s1435, 1

</llo_original>
